<compile_context>
chip_gen: v5e
topology: v5e:2x2
jax: 0.10.0
libtpu: 0.0.40
codegen_flags: <defaults>
</compile_context>

<pallas_src>
import functools

import jax
import jax.numpy as jnp
from jax.experimental import pallas as pl
from jax.experimental.pallas import tpu as pltpu

NEG_INF = -1e30
LN_EPS = 1e-5
BF16 = jnp.bfloat16

ENC_NV = 9    # D-width vectors per encoder layer packed in `vd`
DEC_NV = 15   # D-width vectors per decoder layer packed in `vd`


# --------------------------------------------------------------------------
# In-kernel helpers (traced inside the Pallas body)
# --------------------------------------------------------------------------

def _ln(z, g, b):
    """LayerNorm over the last dim; z (S, D) f32, g/b (D,) f32."""
    mu = jnp.mean(z, axis=-1, keepdims=True)
    zc = z - mu
    var = jnp.mean(zc * zc, axis=-1, keepdims=True)
    return zc * jax.lax.rsqrt(var + LN_EPS) * g + b


def _mm(xb, w):
    """bf16 (S, K) @ bf16 (K, N) -> f32 (S, N) on the MXU."""
    return jnp.dot(xb, w, preferred_element_type=jnp.float32)


def _causal_mask(s):
    """(s, s) bool, True where attention is allowed (j <= i)."""
    i = jax.lax.broadcasted_iota(jnp.int32, (s, s), 0)
    j = jax.lax.broadcasted_iota(jnp.int32, (s, s), 1)
    return j <= i


def _attend(q, k, v, mask, scale):
    """Single-head attention: softmax(q k^T * scale, masked) @ v.

    q (Sq, D), k/v (Sk, D) f32; contraction on last dims (no k.T transpose)."""
    s = jax.lax.dot_general(
        q.astype(BF16), k.astype(BF16),
        dimension_numbers=(((1,), (1,)), ((), ())),
        preferred_element_type=jnp.float32) * scale
    if mask is not None:
        s = jnp.where(mask, s, NEG_INF)
    s = s - jnp.max(s, axis=-1, keepdims=True)
    p = jnp.exp(s)
    p = p * pl.reciprocal(jnp.sum(p, axis=-1, keepdims=True), approx=False)
    return jnp.dot(p.astype(BF16), v.astype(BF16),
                   preferred_element_type=jnp.float32)


# --------------------------------------------------------------------------
# Fused encoder+decoder stack kernel, grid=(B,)
#
# Packed-parameter layout:
#   wdd (4*Le + 8*Ld, D, D) bf16:
#       enc layer l  -> rows 4l + [wq, wk, wv, wo]
#       dec layer l  -> rows 4Le + 8l + [swq, swk, swv, swo, cwq, cwk, cwv, cwo]
#   w1  (Le+Ld, D, F) bf16, w2 (Le+Ld, F, D) bf16, vf (Le+Ld, F) f32:
#       rows 0..Le-1 encoder, Le..Le+Ld-1 decoder
#   vd  (9*Le + 2 + 15*Ld + 2, D) f32:
#       enc layer l  -> rows 9l + [bq,bk,bv,bo, b2, n1g,n1b, n2g,n2b]
#       enc final    -> rows 9Le + [g, b]
#       dec layer l  -> rows 9Le+2+15l + [sbq,sbk,sbv,sbo, cbq,cbk,cbv,cbo,
#                                          b2, n1g,n1b, n2g,n2b, n3g,n3b]
#       dec final    -> rows 9Le+2+15Ld + [g, b]
# --------------------------------------------------------------------------

def _hfp_stack_kernel(src_ref, tgt_ref, wdd_ref, w1_ref, w2_ref, vd_ref, vf_ref,
                      mem_ref, out_ref, *, n_enc, n_dec, scale):
    se = src_ref.shape[1]
    sd = tgt_ref.shape[1]
    mask_e = _causal_mask(se)
    mask_d = _causal_mask(sd)

    # ---------------- encoder stack ----------------
    x = src_ref[0]                                   # (Se, D) f32
    for l in range(n_enc):
        w0 = 4 * l
        v0 = ENC_NV * l
        xb = x.astype(BF16)
        q = _mm(xb, wdd_ref[w0 + 0]) + vd_ref[v0 + 0]
        k = _mm(xb, wdd_ref[w0 + 1]) + vd_ref[v0 + 1]
        v = _mm(xb, wdd_ref[w0 + 2]) + vd_ref[v0 + 2]
        a = _attend(q, k, v, mask_e, scale)
        a = _mm(a.astype(BF16), wdd_ref[w0 + 3]) + vd_ref[v0 + 3]
        x = _ln(x + a, vd_ref[v0 + 5], vd_ref[v0 + 6])
        xb = x.astype(BF16)
        h = jnp.maximum(_mm(xb, w1_ref[l]) + vf_ref[l], 0.0)
        f = _mm(h.astype(BF16), w2_ref[l]) + vd_ref[v0 + 4]
        x = _ln(x + f, vd_ref[v0 + 7], vd_ref[v0 + 8])
    ef = ENC_NV * n_enc
    mem = _ln(x, vd_ref[ef], vd_ref[ef + 1])         # final encoder norm
    mem_ref[0] = mem.astype(mem_ref.dtype)
    memb = mem.astype(BF16)                          # stays resident for decoder

    # ---------------- decoder stack ----------------
    dw = 4 * n_enc
    dv = ef + 2
    y = tgt_ref[0]                                   # (Sd, D) f32
    for l in range(n_dec):
        w0 = dw + 8 * l
        v0 = dv + DEC_NV * l
        fi = n_enc + l
        # masked self-attention
        yb = y.astype(BF16)
        q = _mm(yb, wdd_ref[w0 + 0]) + vd_ref[v0 + 0]
        k = _mm(yb, wdd_ref[w0 + 1]) + vd_ref[v0 + 1]
        v = _mm(yb, wdd_ref[w0 + 2]) + vd_ref[v0 + 2]
        a = _attend(q, k, v, mask_d, scale)
        a = _mm(a.astype(BF16), wdd_ref[w0 + 3]) + vd_ref[v0 + 3]
        y = _ln(y + a, vd_ref[v0 + 9], vd_ref[v0 + 10])
        # cross-attention on memory (no mask)
        yb = y.astype(BF16)
        q = _mm(yb, wdd_ref[w0 + 4]) + vd_ref[v0 + 4]
        k = _mm(memb, wdd_ref[w0 + 5]) + vd_ref[v0 + 5]
        v = _mm(memb, wdd_ref[w0 + 6]) + vd_ref[v0 + 6]
        c = _attend(q, k, v, None, scale)
        c = _mm(c.astype(BF16), wdd_ref[w0 + 7]) + vd_ref[v0 + 7]
        y = _ln(y + c, vd_ref[v0 + 11], vd_ref[v0 + 12])
        # feed-forward (relu)
        yb = y.astype(BF16)
        h = jnp.maximum(_mm(yb, w1_ref[fi]) + vf_ref[fi], 0.0)
        f = _mm(h.astype(BF16), w2_ref[fi]) + vd_ref[v0 + 8]
        y = _ln(y + f, vd_ref[v0 + 13], vd_ref[v0 + 14])
    df = dv + DEC_NV * n_dec
    out_ref[0] = _ln(y, vd_ref[df], vd_ref[df + 1]).astype(out_ref.dtype)


def run_transformer(src, tgt, params):
    """src (B, Se, D) f32, tgt (B, Sd, D) f32 -> (mem (B,Se,D), out (B,Sd,D))."""
    B, Se, D = src.shape
    Sd = tgt.shape[1]
    enc_layers = params['encoder_layers']
    dec_layers = params['decoder_layers']
    Le, Ld = len(enc_layers), len(dec_layers)

    # ---- pack parameters into a handful of arrays (few DMAs, few BlockSpecs)
    wdd, vd = [], []
    for p in enc_layers:
        a = p['self_attn']
        wdd += [a['wq'], a['wk'], a['wv'], a['wo']]
        vd += [a['bq'], a['bk'], a['bv'], a['bo'], p['b2'],
               p['norm1_g'], p['norm1_b'], p['norm2_g'], p['norm2_b']]
    vd += [params['enc_norm_g'], params['enc_norm_b']]
    for p in dec_layers:
        a, c = p['self_attn'], p['cross_attn']
        wdd += [a['wq'], a['wk'], a['wv'], a['wo'],
                c['wq'], c['wk'], c['wv'], c['wo']]
        vd += [a['bq'], a['bk'], a['bv'], a['bo'],
               c['bq'], c['bk'], c['bv'], c['bo'], p['b2'],
               p['norm1_g'], p['norm1_b'], p['norm2_g'], p['norm2_b'],
               p['norm3_g'], p['norm3_b']]
    vd += [params['dec_norm_g'], params['dec_norm_b']]

    wdd = jnp.stack(wdd).astype(BF16)                          # (4Le+8Ld, D, D)
    vd = jnp.stack(vd)                                         # (9Le+15Ld+4, D)
    w1 = jnp.stack([p['w1'] for p in enc_layers]
                   + [p['w1'] for p in dec_layers]).astype(BF16)   # (Le+Ld, D, F)
    w2 = jnp.stack([p['w2'] for p in enc_layers]
                   + [p['w2'] for p in dec_layers]).astype(BF16)   # (Le+Ld, F, D)
    vf = jnp.stack([p['b1'] for p in enc_layers]
                   + [p['b1'] for p in dec_layers])                # (Le+Ld, F)

    kern = functools.partial(_hfp_stack_kernel, n_enc=Le, n_dec=Ld,
                             scale=1.0 / float(D) ** 0.5)

    def full2(s):
        return pl.BlockSpec(s, lambda b: (0, 0))

    def full3(s):
        return pl.BlockSpec(s, lambda b: (0, 0, 0))

    mem, out = pl.pallas_call(
        kern,
        out_shape=(jax.ShapeDtypeStruct((B, Se, D), jnp.float32),
                   jax.ShapeDtypeStruct((B, Sd, D), jnp.float32)),
        grid=(B,),
        in_specs=[pl.BlockSpec((1, Se, D), lambda b: (b, 0, 0)),
                  pl.BlockSpec((1, Sd, D), lambda b: (b, 0, 0)),
                  full3(wdd.shape), full3(w1.shape), full3(w2.shape),
                  full2(vd.shape), full2(vf.shape)],
        out_specs=(pl.BlockSpec((1, Se, D), lambda b: (b, 0, 0)),
                   pl.BlockSpec((1, Sd, D), lambda b: (b, 0, 0))),
        compiler_params=pltpu.CompilerParams(
            dimension_semantics=("parallel",),
            vmem_limit_bytes=32 * 1024 * 1024),
    )(src, tgt, wdd, w1, w2, vd, vf)
    return mem, out


# --------------------------------------------------------------------------
# Forward pass (tiny embeddings + shift in plain JAX, both stacks in Pallas)
# --------------------------------------------------------------------------

def hfp_transformer_forward(params, driver_src, bv_src, hfp_tgt):
    """
    driver_src: (B, d_dr), bv_src: (B, n_alt, d_bv), hfp_tgt: (B, n_waves, d_hfp)
    returns (bv_output (B, n_alt, D), hfp_output (B, n_waves, D))
    """
    B = driver_src.shape[0]
    D = params['dr_emb'].shape[1]

    # --- embedding projections + shift (torch.roll(.., 1); row0 := start token)
    dr_proj = driver_src @ params['dr_emb']                            # (B, D)
    bv_e = jnp.einsum('bsd,dm->bsm', bv_src, params['bv_emb'])         # (B, n_alt, D)
    bv_shift = jnp.concatenate(
        [jnp.broadcast_to(params['bv_start_token'], (B, 1, D)), bv_e[:, :-1, :]],
        axis=1)
    src = dr_proj[:, None, :] + bv_shift + params['bv_position'][None, :, :]

    hfp_e = jnp.einsum('bsd,dm->bsm', hfp_tgt, params['hfp_emb'])      # (B, n_waves, D)
    hfp_shift = jnp.concatenate(
        [jnp.broadcast_to(params['hfp_start_token'], (B, 1, D)), hfp_e[:, :-1, :]],
        axis=1)
    tgt = dr_proj[:, None, :] + hfp_shift

    # --- single fused encoder+decoder kernel (causal masks generated in-kernel)
    mem, out = run_transformer(src, tgt, params)

    # already batch-first, matching the torch .transpose(0,1) outputs
    return mem, out


# --------------------------------------------------------------------------
# Deterministic parameter init (synthetic, mirrors __init__ shapes)
# --------------------------------------------------------------------------

def xavier(key, shape):
    fan_in, fan_out = shape[0], shape[1]
    lim = (6.0 / (fan_in + fan_out)) ** 0.5
    return jax.random.uniform(key, shape, jnp.float32, -lim, lim)


def init_attn_params(key, D):
    ks = jax.random.split(key, 4)
    z = jnp.zeros((D,), jnp.float32)
    return dict(wq=xavier(ks[0], (D, D)), bq=z,
                wk=xavier(ks[1], (D, D)), bk=z,
                wv=xavier(ks[2], (D, D)), bv=z,
                wo=xavier(ks[3], (D, D)), bo=z)


def init_encoder_layer(key, D, F):
    k = jax.random.split(key, 3)
    return dict(self_attn=init_attn_params(k[0], D),
                w1=xavier(k[1], (D, F)), b1=jnp.zeros((F,), jnp.float32),
                w2=xavier(k[2], (F, D)), b2=jnp.zeros((D,), jnp.float32),
                norm1_g=jnp.ones((D,), jnp.float32), norm1_b=jnp.zeros((D,), jnp.float32),
                norm2_g=jnp.ones((D,), jnp.float32), norm2_b=jnp.zeros((D,), jnp.float32))


def init_decoder_layer(key, D, F):
    k = jax.random.split(key, 4)
    return dict(self_attn=init_attn_params(k[0], D),
                cross_attn=init_attn_params(k[1], D),
                w1=xavier(k[2], (D, F)), b1=jnp.zeros((F,), jnp.float32),
                w2=xavier(k[3], (F, D)), b2=jnp.zeros((D,), jnp.float32),
                norm1_g=jnp.ones((D,), jnp.float32), norm1_b=jnp.zeros((D,), jnp.float32),
                norm2_g=jnp.ones((D,), jnp.float32), norm2_b=jnp.zeros((D,), jnp.float32),
                norm3_g=jnp.ones((D,), jnp.float32), norm3_b=jnp.zeros((D,), jnp.float32))


if __name__ == "__main__":
    # small shapes consistent with the module's forward contract
    B, d_dr, d_bv, d_hfp = 2, 8, 4, 4
    n_alt, n_waves = 16, 8
    D, F = 64, 128           # d_model, dim_feedforward (nhead=1, 1 enc / 1 dec layer)

    key = jax.random.PRNGKey(0)
    keys = jax.random.split(key, 12)

    params = dict(
        dr_emb=xavier(keys[0], (d_dr, D)),
        bv_emb=xavier(keys[1], (d_bv, D)),
        hfp_emb=xavier(keys[2], (d_hfp, D)),
        bv_position=jax.random.normal(keys[3], (n_alt, D), jnp.float32),
        bv_start_token=jax.random.normal(keys[4], (1, D), jnp.float32),
        hfp_start_token=jax.random.normal(keys[5], (1, D), jnp.float32),
        encoder_layers=[init_encoder_layer(keys[6], D, F)],
        enc_norm_g=jnp.ones((D,), jnp.float32),
        enc_norm_b=jnp.zeros((D,), jnp.float32),
        decoder_layers=[init_decoder_layer(keys[7], D, F)],
        dec_norm_g=jnp.ones((D,), jnp.float32),
        dec_norm_b=jnp.zeros((D,), jnp.float32),
    )

    driver_src = jax.random.normal(keys[8], (B, d_dr), jnp.float32)
    bv_src = jax.random.normal(keys[9], (B, n_alt, d_bv), jnp.float32)
    hfp_tgt = jax.random.normal(keys[10], (B, n_waves, d_hfp), jnp.float32)

    fwd = jax.jit(hfp_transformer_forward)
    bv_out, hfp_out = fwd(params, driver_src, bv_src, hfp_tgt)
    jax.block_until_ready((bv_out, hfp_out))

    assert bv_out.shape == (B, n_alt, D), bv_out.shape
    assert hfp_out.shape == (B, n_waves, D), hfp_out.shape
    assert jnp.all(jnp.isfinite(bv_out)) and jnp.all(jnp.isfinite(hfp_out))
    print("KERNEL_OK")
</pallas_src>

<mosaic_0001>
module attributes {stable_mosaic.version = 11 : i64} {
  func.func @_hfp_stack_kernel(%arg0: i32, %arg1: memref<1x16x64xf32, #tpu.memory_space<vmem>>, %arg2: memref<1x8x64xf32, #tpu.memory_space<vmem>>, %arg3: memref<12x64x64xbf16, #tpu.memory_space<vmem>>, %arg4: memref<2x64x128xbf16, #tpu.memory_space<vmem>>, %arg5: memref<2x128x64xbf16, #tpu.memory_space<vmem>>, %arg6: memref<28x64xf32, #tpu.memory_space<vmem>>, %arg7: memref<2x128xf32, #tpu.memory_space<vmem>>, %arg8: memref<1x16x64xf32, #tpu.memory_space<vmem>>, %arg9: memref<1x8x64xf32, #tpu.memory_space<vmem>>) attributes {dimension_semantics = [#tpu.dimension_semantics<parallel>], iteration_bounds = array<i64: 2>, scalar_prefetch = 0 : i64, scratch_operands = 0 : i64, tpu.core_type = #tpu.core_type<tc>, window_params = [{transform_indices = @transform_0, window_bounds = array<i64: 1, 16, 64>}, {transform_indices = @transform_1, window_bounds = array<i64: 1, 8, 64>}, {pipeline_mode = #tpu.pipeline_mode<synchronous>, transform_indices = @transform_2, window_bounds = array<i64: 12, 64, 64>}, {pipeline_mode = #tpu.pipeline_mode<synchronous>, transform_indices = @transform_3, window_bounds = array<i64: 2, 64, 128>}, {pipeline_mode = #tpu.pipeline_mode<synchronous>, transform_indices = @transform_4, window_bounds = array<i64: 2, 128, 64>}, {pipeline_mode = #tpu.pipeline_mode<synchronous>, transform_indices = @transform_5, window_bounds = array<i64: 28, 64>}, {pipeline_mode = #tpu.pipeline_mode<synchronous>, transform_indices = @transform_6, window_bounds = array<i64: 2, 128>}, {transform_indices = @transform_7, window_bounds = array<i64: 1, 16, 64>}, {transform_indices = @transform_8, window_bounds = array<i64: 1, 8, 64>}]} {
    %0 = tpu.iota {dimensions = array<i32: 0>} : vector<16x16xi32>
    %1 = tpu.iota {dimensions = array<i32: 1>} : vector<16x16xi32>
    %2 = arith.cmpi sle, %1, %0 : vector<16x16xi32>
    %3 = tpu.iota {dimensions = array<i32: 0>} : vector<8x8xi32>
    %4 = tpu.iota {dimensions = array<i32: 1>} : vector<8x8xi32>
    %5 = arith.cmpi sle, %4, %3 : vector<8x8xi32>
    %c0 = arith.constant 0 : index
    %c0_0 = arith.constant 0 : index
    %c0_1 = arith.constant 0 : index
    %6 = vector.load %arg1[%c0, %c0_0, %c0_1] : memref<1x16x64xf32, #tpu.memory_space<vmem>>, vector<1x16x64xf32>
    %7 = vector.shape_cast %6 : vector<1x16x64xf32> to vector<16x64xf32>
    %8 = arith.truncf %7 : vector<16x64xf32> to vector<16x64xbf16>
    %c0_2 = arith.constant 0 : index
    %c0_3 = arith.constant 0 : index
    %c0_4 = arith.constant 0 : index
    %9 = vector.load %arg3[%c0_2, %c0_3, %c0_4] : memref<12x64x64xbf16, #tpu.memory_space<vmem>>, vector<1x64x64xbf16>
    %10 = vector.shape_cast %9 : vector<1x64x64xbf16> to vector<64x64xbf16>
    %cst = arith.constant dense<0.000000e+00> : vector<16x64xf32>
    %11 = tpu.matmul %8, %10, %cst {dimension_numbers = #tpu.dot_dimension_numbers<[1], [0], [0], [1], [0, 0, 1, 1], [], []>} : vector<16x64xbf16>, vector<64x64xbf16>, vector<16x64xf32> -> vector<16x64xf32>
    %c0_5 = arith.constant 0 : index
    %c0_6 = arith.constant 0 : index
    %12 = vector.load %arg6[%c0_5, %c0_6] : memref<28x64xf32, #tpu.memory_space<vmem>>, vector<1x64xf32>
    %13 = vector.shape_cast %12 : vector<1x64xf32> to vector<64xf32>
    %14 = vector.shape_cast %13 : vector<64xf32> to vector<1x64xf32>
    %15 = vector.broadcast %14 : vector<1x64xf32> to vector<16x64xf32>
    %16 = arith.addf %11, %15 : vector<16x64xf32>
    %c1 = arith.constant 1 : index
    %c0_7 = arith.constant 0 : index
    %c0_8 = arith.constant 0 : index
    %17 = vector.load %arg3[%c1, %c0_7, %c0_8] : memref<12x64x64xbf16, #tpu.memory_space<vmem>>, vector<1x64x64xbf16>
    %18 = vector.shape_cast %17 : vector<1x64x64xbf16> to vector<64x64xbf16>
    %cst_9 = arith.constant dense<0.000000e+00> : vector<16x64xf32>
    %19 = tpu.matmul %8, %18, %cst_9 {dimension_numbers = #tpu.dot_dimension_numbers<[1], [0], [0], [1], [0, 0, 1, 1], [], []>} : vector<16x64xbf16>, vector<64x64xbf16>, vector<16x64xf32> -> vector<16x64xf32>
    %c1_10 = arith.constant 1 : index
    %c0_11 = arith.constant 0 : index
    %20 = vector.load %arg6[%c1_10, %c0_11] : memref<28x64xf32, #tpu.memory_space<vmem>>, vector<1x64xf32>
    %21 = vector.shape_cast %20 : vector<1x64xf32> to vector<64xf32>
    %22 = vector.shape_cast %21 : vector<64xf32> to vector<1x64xf32>
    %23 = vector.broadcast %22 : vector<1x64xf32> to vector<16x64xf32>
    %24 = arith.addf %19, %23 : vector<16x64xf32>
    %c2 = arith.constant 2 : index
    %c0_12 = arith.constant 0 : index
    %c0_13 = arith.constant 0 : index
    %25 = vector.load %arg3[%c2, %c0_12, %c0_13] : memref<12x64x64xbf16, #tpu.memory_space<vmem>>, vector<1x64x64xbf16>
    %26 = vector.shape_cast %25 : vector<1x64x64xbf16> to vector<64x64xbf16>
    %cst_14 = arith.constant dense<0.000000e+00> : vector<16x64xf32>
    %27 = tpu.matmul %8, %26, %cst_14 {dimension_numbers = #tpu.dot_dimension_numbers<[1], [0], [0], [1], [0, 0, 1, 1], [], []>} : vector<16x64xbf16>, vector<64x64xbf16>, vector<16x64xf32> -> vector<16x64xf32>
    %c2_15 = arith.constant 2 : index
    %c0_16 = arith.constant 0 : index
    %28 = vector.load %arg6[%c2_15, %c0_16] : memref<28x64xf32, #tpu.memory_space<vmem>>, vector<1x64xf32>
    %29 = vector.shape_cast %28 : vector<1x64xf32> to vector<64xf32>
    %30 = vector.shape_cast %29 : vector<64xf32> to vector<1x64xf32>
    %31 = vector.broadcast %30 : vector<1x64xf32> to vector<16x64xf32>
    %32 = arith.addf %27, %31 : vector<16x64xf32>
    %33 = arith.truncf %16 : vector<16x64xf32> to vector<16x64xbf16>
    %34 = arith.truncf %24 : vector<16x64xf32> to vector<16x64xbf16>
    %cst_17 = arith.constant dense<0.000000e+00> : vector<16x16xf32>
    %35 = tpu.matmul %33, %34, %cst_17 {dimension_numbers = #tpu.dot_dimension_numbers<[1], [1], [0], [0], [0, 0, 1, 0], [], []>} : vector<16x64xbf16>, vector<16x64xbf16>, vector<16x16xf32> -> vector<16x16xf32>
    %cst_18 = arith.constant 1.250000e-01 : f32
    %36 = vector.broadcast %cst_18 : f32 to vector<16x16xf32>
    %37 = arith.mulf %35, %36 : vector<16x16xf32>
    %cst_19 = arith.constant -1.000000e+30 : f32
    %38 = vector.broadcast %cst_19 : f32 to vector<16x16xf32>
    %39 = arith.select %2, %37, %38 : vector<16x16xi1>, vector<16x16xf32>
    %cst_20 = arith.constant dense<0xFF800000> : vector<16xf32>
    %40 = vector.multi_reduction <maximumf>, %39, %cst_20 [1] : vector<16x16xf32> to vector<16xf32>
    %41 = vector.shape_cast %40 : vector<16xf32> to vector<16x1xf32>
    %42 = vector.broadcast %41 : vector<16x1xf32> to vector<16x16xf32>
    %43 = arith.subf %39, %42 : vector<16x16xf32>
    %44 = math.exp %43 : vector<16x16xf32>
    %cst_21 = arith.constant dense<0.000000e+00> : vector<16xf32>
    %45 = vector.multi_reduction <add>, %44, %cst_21 [1] : vector<16x16xf32> to vector<16xf32>
    %46 = vector.shape_cast %45 : vector<16xf32> to vector<16x1xf32>
    %47 = tpu.reciprocal %46 : vector<16x1xf32> -> vector<16x1xf32>
    %48 = vector.broadcast %47 : vector<16x1xf32> to vector<16x16xf32>
    %49 = arith.mulf %44, %48 : vector<16x16xf32>
    %50 = arith.truncf %49 : vector<16x16xf32> to vector<16x16xbf16>
    %51 = arith.truncf %32 : vector<16x64xf32> to vector<16x64xbf16>
    %cst_22 = arith.constant dense<0.000000e+00> : vector<16x64xf32>
    %52 = tpu.matmul %50, %51, %cst_22 {dimension_numbers = #tpu.dot_dimension_numbers<[1], [0], [0], [1], [0, 0, 1, 1], [], []>} : vector<16x16xbf16>, vector<16x64xbf16>, vector<16x64xf32> -> vector<16x64xf32>
    %53 = arith.truncf %52 : vector<16x64xf32> to vector<16x64xbf16>
    %c3 = arith.constant 3 : index
    %c0_23 = arith.constant 0 : index
    %c0_24 = arith.constant 0 : index
    %54 = vector.load %arg3[%c3, %c0_23, %c0_24] : memref<12x64x64xbf16, #tpu.memory_space<vmem>>, vector<1x64x64xbf16>
    %55 = vector.shape_cast %54 : vector<1x64x64xbf16> to vector<64x64xbf16>
    %cst_25 = arith.constant dense<0.000000e+00> : vector<16x64xf32>
    %56 = tpu.matmul %53, %55, %cst_25 {dimension_numbers = #tpu.dot_dimension_numbers<[1], [0], [0], [1], [0, 0, 1, 1], [], []>} : vector<16x64xbf16>, vector<64x64xbf16>, vector<16x64xf32> -> vector<16x64xf32>
    %c3_26 = arith.constant 3 : index
    %c0_27 = arith.constant 0 : index
    %57 = vector.load %arg6[%c3_26, %c0_27] : memref<28x64xf32, #tpu.memory_space<vmem>>, vector<1x64xf32>
    %58 = vector.shape_cast %57 : vector<1x64xf32> to vector<64xf32>
    %59 = vector.shape_cast %58 : vector<64xf32> to vector<1x64xf32>
    %60 = vector.broadcast %59 : vector<1x64xf32> to vector<16x64xf32>
    %61 = arith.addf %56, %60 : vector<16x64xf32>
    %62 = arith.addf %7, %61 : vector<16x64xf32>
    %c5 = arith.constant 5 : index
    %c0_28 = arith.constant 0 : index
    %63 = vector.load %arg6[%c5, %c0_28] : memref<28x64xf32, #tpu.memory_space<vmem>>, vector<1x64xf32>
    %64 = vector.shape_cast %63 : vector<1x64xf32> to vector<64xf32>
    %c6 = arith.constant 6 : index
    %c0_29 = arith.constant 0 : index
    %65 = vector.load %arg6[%c6, %c0_29] : memref<28x64xf32, #tpu.memory_space<vmem>>, vector<1x64xf32>
    %66 = vector.shape_cast %65 : vector<1x64xf32> to vector<64xf32>
    %cst_30 = arith.constant dense<0.000000e+00> : vector<16xf32>
    %67 = vector.multi_reduction <add>, %62, %cst_30 [1] : vector<16x64xf32> to vector<16xf32>
    %68 = vector.shape_cast %67 : vector<16xf32> to vector<16x1xf32>
    %cst_31 = arith.constant 6.400000e+01 : f32
    %69 = vector.broadcast %cst_31 : f32 to vector<16x1xf32>
    %70 = arith.divf %68, %69 : vector<16x1xf32>
    %71 = vector.broadcast %70 : vector<16x1xf32> to vector<16x64xf32>
    %72 = arith.subf %62, %71 : vector<16x64xf32>
    %73 = arith.mulf %72, %72 : vector<16x64xf32>
    %cst_32 = arith.constant dense<0.000000e+00> : vector<16xf32>
    %74 = vector.multi_reduction <add>, %73, %cst_32 [1] : vector<16x64xf32> to vector<16xf32>
    %75 = vector.shape_cast %74 : vector<16xf32> to vector<16x1xf32>
    %cst_33 = arith.constant 6.400000e+01 : f32
    %76 = vector.broadcast %cst_33 : f32 to vector<16x1xf32>
    %77 = arith.divf %75, %76 : vector<16x1xf32>
    %cst_34 = arith.constant 9.99999974E-6 : f32
    %78 = vector.broadcast %cst_34 : f32 to vector<16x1xf32>
    %79 = arith.addf %77, %78 : vector<16x1xf32>
    %80 = math.rsqrt %79 : vector<16x1xf32>
    %81 = vector.broadcast %80 : vector<16x1xf32> to vector<16x64xf32>
    %82 = arith.mulf %72, %81 : vector<16x64xf32>
    %83 = vector.shape_cast %64 : vector<64xf32> to vector<1x64xf32>
    %84 = vector.broadcast %83 : vector<1x64xf32> to vector<16x64xf32>
    %85 = arith.mulf %82, %84 : vector<16x64xf32>
    %86 = vector.shape_cast %66 : vector<64xf32> to vector<1x64xf32>
    %87 = vector.broadcast %86 : vector<1x64xf32> to vector<16x64xf32>
    %88 = arith.addf %85, %87 : vector<16x64xf32>
    %89 = arith.truncf %88 : vector<16x64xf32> to vector<16x64xbf16>
    %c0_35 = arith.constant 0 : index
    %c0_36 = arith.constant 0 : index
    %c0_37 = arith.constant 0 : index
    %90 = vector.load %arg4[%c0_35, %c0_36, %c0_37] : memref<2x64x128xbf16, #tpu.memory_space<vmem>>, vector<1x64x128xbf16>
    %91 = vector.shape_cast %90 : vector<1x64x128xbf16> to vector<64x128xbf16>
    %cst_38 = arith.constant dense<0.000000e+00> : vector<16x128xf32>
    %92 = tpu.matmul %89, %91, %cst_38 {dimension_numbers = #tpu.dot_dimension_numbers<[1], [0], [0], [1], [0, 0, 1, 1], [], []>} : vector<16x64xbf16>, vector<64x128xbf16>, vector<16x128xf32> -> vector<16x128xf32>
    %c0_39 = arith.constant 0 : index
    %c0_40 = arith.constant 0 : index
    %93 = vector.load %arg7[%c0_39, %c0_40] : memref<2x128xf32, #tpu.memory_space<vmem>>, vector<1x128xf32>
    %94 = vector.shape_cast %93 : vector<1x128xf32> to vector<128xf32>
    %95 = vector.shape_cast %94 : vector<128xf32> to vector<1x128xf32>
    %96 = vector.broadcast %95 : vector<1x128xf32> to vector<16x128xf32>
    %97 = arith.addf %92, %96 : vector<16x128xf32>
    %cst_41 = arith.constant 0.000000e+00 : f32
    %98 = vector.broadcast %cst_41 : f32 to vector<16x128xf32>
    %99 = arith.maximumf %97, %98 : vector<16x128xf32>
    %100 = arith.truncf %99 : vector<16x128xf32> to vector<16x128xbf16>
    %c0_42 = arith.constant 0 : index
    %c0_43 = arith.constant 0 : index
    %c0_44 = arith.constant 0 : index
    %101 = vector.load %arg5[%c0_42, %c0_43, %c0_44] : memref<2x128x64xbf16, #tpu.memory_space<vmem>>, vector<1x128x64xbf16>
    %102 = vector.shape_cast %101 : vector<1x128x64xbf16> to vector<128x64xbf16>
    %cst_45 = arith.constant dense<0.000000e+00> : vector<16x64xf32>
    %103 = tpu.matmul %100, %102, %cst_45 {dimension_numbers = #tpu.dot_dimension_numbers<[1], [0], [0], [1], [0, 0, 1, 1], [], []>} : vector<16x128xbf16>, vector<128x64xbf16>, vector<16x64xf32> -> vector<16x64xf32>
    %c4 = arith.constant 4 : index
    %c0_46 = arith.constant 0 : index
    %104 = vector.load %arg6[%c4, %c0_46] : memref<28x64xf32, #tpu.memory_space<vmem>>, vector<1x64xf32>
    %105 = vector.shape_cast %104 : vector<1x64xf32> to vector<64xf32>
    %106 = vector.shape_cast %105 : vector<64xf32> to vector<1x64xf32>
    %107 = vector.broadcast %106 : vector<1x64xf32> to vector<16x64xf32>
    %108 = arith.addf %103, %107 : vector<16x64xf32>
    %109 = arith.addf %88, %108 : vector<16x64xf32>
    %c7 = arith.constant 7 : index
    %c0_47 = arith.constant 0 : index
    %110 = vector.load %arg6[%c7, %c0_47] : memref<28x64xf32, #tpu.memory_space<vmem>>, vector<1x64xf32>
    %111 = vector.shape_cast %110 : vector<1x64xf32> to vector<64xf32>
    %c8 = arith.constant 8 : index
    %c0_48 = arith.constant 0 : index
    %112 = vector.load %arg6[%c8, %c0_48] : memref<28x64xf32, #tpu.memory_space<vmem>>, vector<1x64xf32>
    %113 = vector.shape_cast %112 : vector<1x64xf32> to vector<64xf32>
    %cst_49 = arith.constant dense<0.000000e+00> : vector<16xf32>
    %114 = vector.multi_reduction <add>, %109, %cst_49 [1] : vector<16x64xf32> to vector<16xf32>
    %115 = vector.shape_cast %114 : vector<16xf32> to vector<16x1xf32>
    %cst_50 = arith.constant 6.400000e+01 : f32
    %116 = vector.broadcast %cst_50 : f32 to vector<16x1xf32>
    %117 = arith.divf %115, %116 : vector<16x1xf32>
    %118 = vector.broadcast %117 : vector<16x1xf32> to vector<16x64xf32>
    %119 = arith.subf %109, %118 : vector<16x64xf32>
    %120 = arith.mulf %119, %119 : vector<16x64xf32>
    %cst_51 = arith.constant dense<0.000000e+00> : vector<16xf32>
    %121 = vector.multi_reduction <add>, %120, %cst_51 [1] : vector<16x64xf32> to vector<16xf32>
    %122 = vector.shape_cast %121 : vector<16xf32> to vector<16x1xf32>
    %cst_52 = arith.constant 6.400000e+01 : f32
    %123 = vector.broadcast %cst_52 : f32 to vector<16x1xf32>
    %124 = arith.divf %122, %123 : vector<16x1xf32>
    %cst_53 = arith.constant 9.99999974E-6 : f32
    %125 = vector.broadcast %cst_53 : f32 to vector<16x1xf32>
    %126 = arith.addf %124, %125 : vector<16x1xf32>
    %127 = math.rsqrt %126 : vector<16x1xf32>
    %128 = vector.broadcast %127 : vector<16x1xf32> to vector<16x64xf32>
    %129 = arith.mulf %119, %128 : vector<16x64xf32>
    %130 = vector.shape_cast %111 : vector<64xf32> to vector<1x64xf32>
    %131 = vector.broadcast %130 : vector<1x64xf32> to vector<16x64xf32>
    %132 = arith.mulf %129, %131 : vector<16x64xf32>
    %133 = vector.shape_cast %113 : vector<64xf32> to vector<1x64xf32>
    %134 = vector.broadcast %133 : vector<1x64xf32> to vector<16x64xf32>
    %135 = arith.addf %132, %134 : vector<16x64xf32>
    %c9 = arith.constant 9 : index
    %c0_54 = arith.constant 0 : index
    %136 = vector.load %arg6[%c9, %c0_54] : memref<28x64xf32, #tpu.memory_space<vmem>>, vector<1x64xf32>
    %137 = vector.shape_cast %136 : vector<1x64xf32> to vector<64xf32>
    %c10 = arith.constant 10 : index
    %c0_55 = arith.constant 0 : index
    %138 = vector.load %arg6[%c10, %c0_55] : memref<28x64xf32, #tpu.memory_space<vmem>>, vector<1x64xf32>
    %139 = vector.shape_cast %138 : vector<1x64xf32> to vector<64xf32>
    %cst_56 = arith.constant dense<0.000000e+00> : vector<16xf32>
    %140 = vector.multi_reduction <add>, %135, %cst_56 [1] : vector<16x64xf32> to vector<16xf32>
    %141 = vector.shape_cast %140 : vector<16xf32> to vector<16x1xf32>
    %cst_57 = arith.constant 6.400000e+01 : f32
    %142 = vector.broadcast %cst_57 : f32 to vector<16x1xf32>
    %143 = arith.divf %141, %142 : vector<16x1xf32>
    %144 = vector.broadcast %143 : vector<16x1xf32> to vector<16x64xf32>
    %145 = arith.subf %135, %144 : vector<16x64xf32>
    %146 = arith.mulf %145, %145 : vector<16x64xf32>
    %cst_58 = arith.constant dense<0.000000e+00> : vector<16xf32>
    %147 = vector.multi_reduction <add>, %146, %cst_58 [1] : vector<16x64xf32> to vector<16xf32>
    %148 = vector.shape_cast %147 : vector<16xf32> to vector<16x1xf32>
    %cst_59 = arith.constant 6.400000e+01 : f32
    %149 = vector.broadcast %cst_59 : f32 to vector<16x1xf32>
    %150 = arith.divf %148, %149 : vector<16x1xf32>
    %cst_60 = arith.constant 9.99999974E-6 : f32
    %151 = vector.broadcast %cst_60 : f32 to vector<16x1xf32>
    %152 = arith.addf %150, %151 : vector<16x1xf32>
    %153 = math.rsqrt %152 : vector<16x1xf32>
    %154 = vector.broadcast %153 : vector<16x1xf32> to vector<16x64xf32>
    %155 = arith.mulf %145, %154 : vector<16x64xf32>
    %156 = vector.shape_cast %137 : vector<64xf32> to vector<1x64xf32>
    %157 = vector.broadcast %156 : vector<1x64xf32> to vector<16x64xf32>
    %158 = arith.mulf %155, %157 : vector<16x64xf32>
    %159 = vector.shape_cast %139 : vector<64xf32> to vector<1x64xf32>
    %160 = vector.broadcast %159 : vector<1x64xf32> to vector<16x64xf32>
    %161 = arith.addf %158, %160 : vector<16x64xf32>
    %c0_61 = arith.constant 0 : index
    %c0_62 = arith.constant 0 : index
    %c0_63 = arith.constant 0 : index
    %162 = vector.load %arg8[%c0_61, %c0_62, %c0_63] : memref<1x16x64xf32, #tpu.memory_space<vmem>>, vector<1x16x64xf32>
    %163 = vector.shape_cast %162 : vector<1x16x64xf32> to vector<16x64xf32>
    %164 = vector.shape_cast %161 : vector<16x64xf32> to vector<1x16x64xf32>
    tpu.vector_store %arg8[%c0_61, %c0_62, %c0_63], %164 {strides = array<i32>} : memref<1x16x64xf32, #tpu.memory_space<vmem>>, vector<1x16x64xf32>,
    %165 = arith.truncf %161 : vector<16x64xf32> to vector<16x64xbf16>
    %c0_64 = arith.constant 0 : index
    %c0_65 = arith.constant 0 : index
    %c0_66 = arith.constant 0 : index
    %166 = vector.load %arg2[%c0_64, %c0_65, %c0_66] : memref<1x8x64xf32, #tpu.memory_space<vmem>>, vector<1x8x64xf32>
    %167 = vector.shape_cast %166 : vector<1x8x64xf32> to vector<8x64xf32>
    %168 = arith.truncf %167 : vector<8x64xf32> to vector<8x64xbf16>
    %c4_67 = arith.constant 4 : index
    %c0_68 = arith.constant 0 : index
    %c0_69 = arith.constant 0 : index
    %169 = vector.load %arg3[%c4_67, %c0_68, %c0_69] : memref<12x64x64xbf16, #tpu.memory_space<vmem>>, vector<1x64x64xbf16>
    %170 = vector.shape_cast %169 : vector<1x64x64xbf16> to vector<64x64xbf16>
    %cst_70 = arith.constant dense<0.000000e+00> : vector<8x64xf32>
    %171 = tpu.matmul %168, %170, %cst_70 {dimension_numbers = #tpu.dot_dimension_numbers<[1], [0], [0], [1], [0, 0, 1, 1], [], []>} : vector<8x64xbf16>, vector<64x64xbf16>, vector<8x64xf32> -> vector<8x64xf32>
    %c11 = arith.constant 11 : index
    %c0_71 = arith.constant 0 : index
    %172 = vector.load %arg6[%c11, %c0_71] : memref<28x64xf32, #tpu.memory_space<vmem>>, vector<1x64xf32>
    %173 = vector.shape_cast %172 : vector<1x64xf32> to vector<64xf32>
    %174 = vector.shape_cast %173 : vector<64xf32> to vector<1x64xf32>
    %175 = vector.broadcast %174 : vector<1x64xf32> to vector<8x64xf32>
    %176 = arith.addf %171, %175 : vector<8x64xf32>
    %c5_72 = arith.constant 5 : index
    %c0_73 = arith.constant 0 : index
    %c0_74 = arith.constant 0 : index
    %177 = vector.load %arg3[%c5_72, %c0_73, %c0_74] : memref<12x64x64xbf16, #tpu.memory_space<vmem>>, vector<1x64x64xbf16>
    %178 = vector.shape_cast %177 : vector<1x64x64xbf16> to vector<64x64xbf16>
    %cst_75 = arith.constant dense<0.000000e+00> : vector<8x64xf32>
    %179 = tpu.matmul %168, %178, %cst_75 {dimension_numbers = #tpu.dot_dimension_numbers<[1], [0], [0], [1], [0, 0, 1, 1], [], []>} : vector<8x64xbf16>, vector<64x64xbf16>, vector<8x64xf32> -> vector<8x64xf32>
    %c12 = arith.constant 12 : index
    %c0_76 = arith.constant 0 : index
    %180 = vector.load %arg6[%c12, %c0_76] : memref<28x64xf32, #tpu.memory_space<vmem>>, vector<1x64xf32>
    %181 = vector.shape_cast %180 : vector<1x64xf32> to vector<64xf32>
    %182 = vector.shape_cast %181 : vector<64xf32> to vector<1x64xf32>
    %183 = vector.broadcast %182 : vector<1x64xf32> to vector<8x64xf32>
    %184 = arith.addf %179, %183 : vector<8x64xf32>
    %c6_77 = arith.constant 6 : index
    %c0_78 = arith.constant 0 : index
    %c0_79 = arith.constant 0 : index
    %185 = vector.load %arg3[%c6_77, %c0_78, %c0_79] : memref<12x64x64xbf16, #tpu.memory_space<vmem>>, vector<1x64x64xbf16>
    %186 = vector.shape_cast %185 : vector<1x64x64xbf16> to vector<64x64xbf16>
    %cst_80 = arith.constant dense<0.000000e+00> : vector<8x64xf32>
    %187 = tpu.matmul %168, %186, %cst_80 {dimension_numbers = #tpu.dot_dimension_numbers<[1], [0], [0], [1], [0, 0, 1, 1], [], []>} : vector<8x64xbf16>, vector<64x64xbf16>, vector<8x64xf32> -> vector<8x64xf32>
    %c13 = arith.constant 13 : index
    %c0_81 = arith.constant 0 : index
    %188 = vector.load %arg6[%c13, %c0_81] : memref<28x64xf32, #tpu.memory_space<vmem>>, vector<1x64xf32>
    %189 = vector.shape_cast %188 : vector<1x64xf32> to vector<64xf32>
    %190 = vector.shape_cast %189 : vector<64xf32> to vector<1x64xf32>
    %191 = vector.broadcast %190 : vector<1x64xf32> to vector<8x64xf32>
    %192 = arith.addf %187, %191 : vector<8x64xf32>
    %193 = arith.truncf %176 : vector<8x64xf32> to vector<8x64xbf16>
    %194 = arith.truncf %184 : vector<8x64xf32> to vector<8x64xbf16>
    %cst_82 = arith.constant dense<0.000000e+00> : vector<8x8xf32>
    %195 = tpu.matmul %193, %194, %cst_82 {dimension_numbers = #tpu.dot_dimension_numbers<[1], [1], [0], [0], [0, 0, 1, 0], [], []>} : vector<8x64xbf16>, vector<8x64xbf16>, vector<8x8xf32> -> vector<8x8xf32>
    %cst_83 = arith.constant 1.250000e-01 : f32
    %196 = vector.broadcast %cst_83 : f32 to vector<8x8xf32>
    %197 = arith.mulf %195, %196 : vector<8x8xf32>
    %cst_84 = arith.constant -1.000000e+30 : f32
    %198 = vector.broadcast %cst_84 : f32 to vector<8x8xf32>
    %199 = arith.select %5, %197, %198 : vector<8x8xi1>, vector<8x8xf32>
    %cst_85 = arith.constant dense<0xFF800000> : vector<8xf32>
    %200 = vector.multi_reduction <maximumf>, %199, %cst_85 [1] : vector<8x8xf32> to vector<8xf32>
    %201 = vector.shape_cast %200 : vector<8xf32> to vector<8x1xf32>
    %202 = vector.broadcast %201 : vector<8x1xf32> to vector<8x8xf32>
    %203 = arith.subf %199, %202 : vector<8x8xf32>
    %204 = math.exp %203 : vector<8x8xf32>
    %cst_86 = arith.constant dense<0.000000e+00> : vector<8xf32>
    %205 = vector.multi_reduction <add>, %204, %cst_86 [1] : vector<8x8xf32> to vector<8xf32>
    %206 = vector.shape_cast %205 : vector<8xf32> to vector<8x1xf32>
    %207 = tpu.reciprocal %206 : vector<8x1xf32> -> vector<8x1xf32>
    %208 = vector.broadcast %207 : vector<8x1xf32> to vector<8x8xf32>
    %209 = arith.mulf %204, %208 : vector<8x8xf32>
    %210 = arith.truncf %209 : vector<8x8xf32> to vector<8x8xbf16>
    %211 = arith.truncf %192 : vector<8x64xf32> to vector<8x64xbf16>
    %cst_87 = arith.constant dense<0.000000e+00> : vector<8x64xf32>
    %212 = tpu.matmul %210, %211, %cst_87 {dimension_numbers = #tpu.dot_dimension_numbers<[1], [0], [0], [1], [0, 0, 1, 1], [], []>} : vector<8x8xbf16>, vector<8x64xbf16>, vector<8x64xf32> -> vector<8x64xf32>
    %213 = arith.truncf %212 : vector<8x64xf32> to vector<8x64xbf16>
    %c7_88 = arith.constant 7 : index
    %c0_89 = arith.constant 0 : index
    %c0_90 = arith.constant 0 : index
    %214 = vector.load %arg3[%c7_88, %c0_89, %c0_90] : memref<12x64x64xbf16, #tpu.memory_space<vmem>>, vector<1x64x64xbf16>
    %215 = vector.shape_cast %214 : vector<1x64x64xbf16> to vector<64x64xbf16>
    %cst_91 = arith.constant dense<0.000000e+00> : vector<8x64xf32>
    %216 = tpu.matmul %213, %215, %cst_91 {dimension_numbers = #tpu.dot_dimension_numbers<[1], [0], [0], [1], [0, 0, 1, 1], [], []>} : vector<8x64xbf16>, vector<64x64xbf16>, vector<8x64xf32> -> vector<8x64xf32>
    %c14 = arith.constant 14 : index
    %c0_92 = arith.constant 0 : index
    %217 = vector.load %arg6[%c14, %c0_92] : memref<28x64xf32, #tpu.memory_space<vmem>>, vector<1x64xf32>
    %218 = vector.shape_cast %217 : vector<1x64xf32> to vector<64xf32>
    %219 = vector.shape_cast %218 : vector<64xf32> to vector<1x64xf32>
    %220 = vector.broadcast %219 : vector<1x64xf32> to vector<8x64xf32>
    %221 = arith.addf %216, %220 : vector<8x64xf32>
    %222 = arith.addf %167, %221 : vector<8x64xf32>
    %c20 = arith.constant 20 : index
    %c0_93 = arith.constant 0 : index
    %223 = vector.load %arg6[%c20, %c0_93] : memref<28x64xf32, #tpu.memory_space<vmem>>, vector<1x64xf32>
    %224 = vector.shape_cast %223 : vector<1x64xf32> to vector<64xf32>
    %c21 = arith.constant 21 : index
    %c0_94 = arith.constant 0 : index
    %225 = vector.load %arg6[%c21, %c0_94] : memref<28x64xf32, #tpu.memory_space<vmem>>, vector<1x64xf32>
    %226 = vector.shape_cast %225 : vector<1x64xf32> to vector<64xf32>
    %cst_95 = arith.constant dense<0.000000e+00> : vector<8xf32>
    %227 = vector.multi_reduction <add>, %222, %cst_95 [1] : vector<8x64xf32> to vector<8xf32>
    %228 = vector.shape_cast %227 : vector<8xf32> to vector<8x1xf32>
    %cst_96 = arith.constant 6.400000e+01 : f32
    %229 = vector.broadcast %cst_96 : f32 to vector<8x1xf32>
    %230 = arith.divf %228, %229 : vector<8x1xf32>
    %231 = vector.broadcast %230 : vector<8x1xf32> to vector<8x64xf32>
    %232 = arith.subf %222, %231 : vector<8x64xf32>
    %233 = arith.mulf %232, %232 : vector<8x64xf32>
    %cst_97 = arith.constant dense<0.000000e+00> : vector<8xf32>
    %234 = vector.multi_reduction <add>, %233, %cst_97 [1] : vector<8x64xf32> to vector<8xf32>
    %235 = vector.shape_cast %234 : vector<8xf32> to vector<8x1xf32>
    %cst_98 = arith.constant 6.400000e+01 : f32
    %236 = vector.broadcast %cst_98 : f32 to vector<8x1xf32>
    %237 = arith.divf %235, %236 : vector<8x1xf32>
    %cst_99 = arith.constant 9.99999974E-6 : f32
    %238 = vector.broadcast %cst_99 : f32 to vector<8x1xf32>
    %239 = arith.addf %237, %238 : vector<8x1xf32>
    %240 = math.rsqrt %239 : vector<8x1xf32>
    %241 = vector.broadcast %240 : vector<8x1xf32> to vector<8x64xf32>
    %242 = arith.mulf %232, %241 : vector<8x64xf32>
    %243 = vector.shape_cast %224 : vector<64xf32> to vector<1x64xf32>
    %244 = vector.broadcast %243 : vector<1x64xf32> to vector<8x64xf32>
    %245 = arith.mulf %242, %244 : vector<8x64xf32>
    %246 = vector.shape_cast %226 : vector<64xf32> to vector<1x64xf32>
    %247 = vector.broadcast %246 : vector<1x64xf32> to vector<8x64xf32>
    %248 = arith.addf %245, %247 : vector<8x64xf32>
    %249 = arith.truncf %248 : vector<8x64xf32> to vector<8x64xbf16>
    %c8_100 = arith.constant 8 : index
    %c0_101 = arith.constant 0 : index
    %c0_102 = arith.constant 0 : index
    %250 = vector.load %arg3[%c8_100, %c0_101, %c0_102] : memref<12x64x64xbf16, #tpu.memory_space<vmem>>, vector<1x64x64xbf16>
    %251 = vector.shape_cast %250 : vector<1x64x64xbf16> to vector<64x64xbf16>
    %cst_103 = arith.constant dense<0.000000e+00> : vector<8x64xf32>
    %252 = tpu.matmul %249, %251, %cst_103 {dimension_numbers = #tpu.dot_dimension_numbers<[1], [0], [0], [1], [0, 0, 1, 1], [], []>} : vector<8x64xbf16>, vector<64x64xbf16>, vector<8x64xf32> -> vector<8x64xf32>
    %c15 = arith.constant 15 : index
    %c0_104 = arith.constant 0 : index
    %253 = vector.load %arg6[%c15, %c0_104] : memref<28x64xf32, #tpu.memory_space<vmem>>, vector<1x64xf32>
    %254 = vector.shape_cast %253 : vector<1x64xf32> to vector<64xf32>
    %255 = vector.shape_cast %254 : vector<64xf32> to vector<1x64xf32>
    %256 = vector.broadcast %255 : vector<1x64xf32> to vector<8x64xf32>
    %257 = arith.addf %252, %256 : vector<8x64xf32>
    %c9_105 = arith.constant 9 : index
    %c0_106 = arith.constant 0 : index
    %c0_107 = arith.constant 0 : index
    %258 = vector.load %arg3[%c9_105, %c0_106, %c0_107] : memref<12x64x64xbf16, #tpu.memory_space<vmem>>, vector<1x64x64xbf16>
    %259 = vector.shape_cast %258 : vector<1x64x64xbf16> to vector<64x64xbf16>
    %cst_108 = arith.constant dense<0.000000e+00> : vector<16x64xf32>
    %260 = tpu.matmul %165, %259, %cst_108 {dimension_numbers = #tpu.dot_dimension_numbers<[1], [0], [0], [1], [0, 0, 1, 1], [], []>} : vector<16x64xbf16>, vector<64x64xbf16>, vector<16x64xf32> -> vector<16x64xf32>
    %c16 = arith.constant 16 : index
    %c0_109 = arith.constant 0 : index
    %261 = vector.load %arg6[%c16, %c0_109] : memref<28x64xf32, #tpu.memory_space<vmem>>, vector<1x64xf32>
    %262 = vector.shape_cast %261 : vector<1x64xf32> to vector<64xf32>
    %263 = vector.shape_cast %262 : vector<64xf32> to vector<1x64xf32>
    %264 = vector.broadcast %263 : vector<1x64xf32> to vector<16x64xf32>
    %265 = arith.addf %260, %264 : vector<16x64xf32>
    %c10_110 = arith.constant 10 : index
    %c0_111 = arith.constant 0 : index
    %c0_112 = arith.constant 0 : index
    %266 = vector.load %arg3[%c10_110, %c0_111, %c0_112] : memref<12x64x64xbf16, #tpu.memory_space<vmem>>, vector<1x64x64xbf16>
    %267 = vector.shape_cast %266 : vector<1x64x64xbf16> to vector<64x64xbf16>
    %cst_113 = arith.constant dense<0.000000e+00> : vector<16x64xf32>
    %268 = tpu.matmul %165, %267, %cst_113 {dimension_numbers = #tpu.dot_dimension_numbers<[1], [0], [0], [1], [0, 0, 1, 1], [], []>} : vector<16x64xbf16>, vector<64x64xbf16>, vector<16x64xf32> -> vector<16x64xf32>
    %c17 = arith.constant 17 : index
    %c0_114 = arith.constant 0 : index
    %269 = vector.load %arg6[%c17, %c0_114] : memref<28x64xf32, #tpu.memory_space<vmem>>, vector<1x64xf32>
    %270 = vector.shape_cast %269 : vector<1x64xf32> to vector<64xf32>
    %271 = vector.shape_cast %270 : vector<64xf32> to vector<1x64xf32>
    %272 = vector.broadcast %271 : vector<1x64xf32> to vector<16x64xf32>
    %273 = arith.addf %268, %272 : vector<16x64xf32>
    %274 = arith.truncf %257 : vector<8x64xf32> to vector<8x64xbf16>
    %275 = arith.truncf %265 : vector<16x64xf32> to vector<16x64xbf16>
    %cst_115 = arith.constant dense<0.000000e+00> : vector<8x16xf32>
    %276 = tpu.matmul %274, %275, %cst_115 {dimension_numbers = #tpu.dot_dimension_numbers<[1], [1], [0], [0], [0, 0, 1, 0], [], []>} : vector<8x64xbf16>, vector<16x64xbf16>, vector<8x16xf32> -> vector<8x16xf32>
    %cst_116 = arith.constant 1.250000e-01 : f32
    %277 = vector.broadcast %cst_116 : f32 to vector<8x16xf32>
    %278 = arith.mulf %276, %277 : vector<8x16xf32>
    %cst_117 = arith.constant dense<0xFF800000> : vector<8xf32>
    %279 = vector.multi_reduction <maximumf>, %278, %cst_117 [1] : vector<8x16xf32> to vector<8xf32>
    %280 = vector.shape_cast %279 : vector<8xf32> to vector<8x1xf32>
    %281 = vector.broadcast %280 : vector<8x1xf32> to vector<8x16xf32>
    %282 = arith.subf %278, %281 : vector<8x16xf32>
    %283 = math.exp %282 : vector<8x16xf32>
    %cst_118 = arith.constant dense<0.000000e+00> : vector<8xf32>
    %284 = vector.multi_reduction <add>, %283, %cst_118 [1] : vector<8x16xf32> to vector<8xf32>
    %285 = vector.shape_cast %284 : vector<8xf32> to vector<8x1xf32>
    %286 = tpu.reciprocal %285 : vector<8x1xf32> -> vector<8x1xf32>
    %287 = vector.broadcast %286 : vector<8x1xf32> to vector<8x16xf32>
    %288 = arith.mulf %283, %287 : vector<8x16xf32>
    %289 = arith.truncf %288 : vector<8x16xf32> to vector<8x16xbf16>
    %290 = arith.truncf %273 : vector<16x64xf32> to vector<16x64xbf16>
    %cst_119 = arith.constant dense<0.000000e+00> : vector<8x64xf32>
    %291 = tpu.matmul %289, %290, %cst_119 {dimension_numbers = #tpu.dot_dimension_numbers<[1], [0], [0], [1], [0, 0, 1, 1], [], []>} : vector<8x16xbf16>, vector<16x64xbf16>, vector<8x64xf32> -> vector<8x64xf32>
    %292 = arith.truncf %291 : vector<8x64xf32> to vector<8x64xbf16>
    %c11_120 = arith.constant 11 : index
    %c0_121 = arith.constant 0 : index
    %c0_122 = arith.constant 0 : index
    %293 = vector.load %arg3[%c11_120, %c0_121, %c0_122] : memref<12x64x64xbf16, #tpu.memory_space<vmem>>, vector<1x64x64xbf16>
    %294 = vector.shape_cast %293 : vector<1x64x64xbf16> to vector<64x64xbf16>
    %cst_123 = arith.constant dense<0.000000e+00> : vector<8x64xf32>
    %295 = tpu.matmul %292, %294, %cst_123 {dimension_numbers = #tpu.dot_dimension_numbers<[1], [0], [0], [1], [0, 0, 1, 1], [], []>} : vector<8x64xbf16>, vector<64x64xbf16>, vector<8x64xf32> -> vector<8x64xf32>
    %c18 = arith.constant 18 : index
    %c0_124 = arith.constant 0 : index
    %296 = vector.load %arg6[%c18, %c0_124] : memref<28x64xf32, #tpu.memory_space<vmem>>, vector<1x64xf32>
    %297 = vector.shape_cast %296 : vector<1x64xf32> to vector<64xf32>
    %298 = vector.shape_cast %297 : vector<64xf32> to vector<1x64xf32>
    %299 = vector.broadcast %298 : vector<1x64xf32> to vector<8x64xf32>
    %300 = arith.addf %295, %299 : vector<8x64xf32>
    %301 = arith.addf %248, %300 : vector<8x64xf32>
    %c22 = arith.constant 22 : index
    %c0_125 = arith.constant 0 : index
    %302 = vector.load %arg6[%c22, %c0_125] : memref<28x64xf32, #tpu.memory_space<vmem>>, vector<1x64xf32>
    %303 = vector.shape_cast %302 : vector<1x64xf32> to vector<64xf32>
    %c23 = arith.constant 23 : index
    %c0_126 = arith.constant 0 : index
    %304 = vector.load %arg6[%c23, %c0_126] : memref<28x64xf32, #tpu.memory_space<vmem>>, vector<1x64xf32>
    %305 = vector.shape_cast %304 : vector<1x64xf32> to vector<64xf32>
    %cst_127 = arith.constant dense<0.000000e+00> : vector<8xf32>
    %306 = vector.multi_reduction <add>, %301, %cst_127 [1] : vector<8x64xf32> to vector<8xf32>
    %307 = vector.shape_cast %306 : vector<8xf32> to vector<8x1xf32>
    %cst_128 = arith.constant 6.400000e+01 : f32
    %308 = vector.broadcast %cst_128 : f32 to vector<8x1xf32>
    %309 = arith.divf %307, %308 : vector<8x1xf32>
    %310 = vector.broadcast %309 : vector<8x1xf32> to vector<8x64xf32>
    %311 = arith.subf %301, %310 : vector<8x64xf32>
    %312 = arith.mulf %311, %311 : vector<8x64xf32>
    %cst_129 = arith.constant dense<0.000000e+00> : vector<8xf32>
    %313 = vector.multi_reduction <add>, %312, %cst_129 [1] : vector<8x64xf32> to vector<8xf32>
    %314 = vector.shape_cast %313 : vector<8xf32> to vector<8x1xf32>
    %cst_130 = arith.constant 6.400000e+01 : f32
    %315 = vector.broadcast %cst_130 : f32 to vector<8x1xf32>
    %316 = arith.divf %314, %315 : vector<8x1xf32>
    %cst_131 = arith.constant 9.99999974E-6 : f32
    %317 = vector.broadcast %cst_131 : f32 to vector<8x1xf32>
    %318 = arith.addf %316, %317 : vector<8x1xf32>
    %319 = math.rsqrt %318 : vector<8x1xf32>
    %320 = vector.broadcast %319 : vector<8x1xf32> to vector<8x64xf32>
    %321 = arith.mulf %311, %320 : vector<8x64xf32>
    %322 = vector.shape_cast %303 : vector<64xf32> to vector<1x64xf32>
    %323 = vector.broadcast %322 : vector<1x64xf32> to vector<8x64xf32>
    %324 = arith.mulf %321, %323 : vector<8x64xf32>
    %325 = vector.shape_cast %305 : vector<64xf32> to vector<1x64xf32>
    %326 = vector.broadcast %325 : vector<1x64xf32> to vector<8x64xf32>
    %327 = arith.addf %324, %326 : vector<8x64xf32>
    %328 = arith.truncf %327 : vector<8x64xf32> to vector<8x64xbf16>
    %c1_132 = arith.constant 1 : index
    %c0_133 = arith.constant 0 : index
    %c0_134 = arith.constant 0 : index
    %329 = vector.load %arg4[%c1_132, %c0_133, %c0_134] : memref<2x64x128xbf16, #tpu.memory_space<vmem>>, vector<1x64x128xbf16>
    %330 = vector.shape_cast %329 : vector<1x64x128xbf16> to vector<64x128xbf16>
    %cst_135 = arith.constant dense<0.000000e+00> : vector<8x128xf32>
    %331 = tpu.matmul %328, %330, %cst_135 {dimension_numbers = #tpu.dot_dimension_numbers<[1], [0], [0], [1], [0, 0, 1, 1], [], []>} : vector<8x64xbf16>, vector<64x128xbf16>, vector<8x128xf32> -> vector<8x128xf32>
    %c1_136 = arith.constant 1 : index
    %c0_137 = arith.constant 0 : index
    %332 = vector.load %arg7[%c1_136, %c0_137] : memref<2x128xf32, #tpu.memory_space<vmem>>, vector<1x128xf32>
    %333 = vector.shape_cast %332 : vector<1x128xf32> to vector<128xf32>
    %334 = vector.shape_cast %333 : vector<128xf32> to vector<1x128xf32>
    %335 = vector.broadcast %334 : vector<1x128xf32> to vector<8x128xf32>
    %336 = arith.addf %331, %335 : vector<8x128xf32>
    %cst_138 = arith.constant 0.000000e+00 : f32
    %337 = vector.broadcast %cst_138 : f32 to vector<8x128xf32>
    %338 = arith.maximumf %336, %337 : vector<8x128xf32>
    %339 = arith.truncf %338 : vector<8x128xf32> to vector<8x128xbf16>
    %c1_139 = arith.constant 1 : index
    %c0_140 = arith.constant 0 : index
    %c0_141 = arith.constant 0 : index
    %340 = vector.load %arg5[%c1_139, %c0_140, %c0_141] : memref<2x128x64xbf16, #tpu.memory_space<vmem>>, vector<1x128x64xbf16>
    %341 = vector.shape_cast %340 : vector<1x128x64xbf16> to vector<128x64xbf16>
    %cst_142 = arith.constant dense<0.000000e+00> : vector<8x64xf32>
    %342 = tpu.matmul %339, %341, %cst_142 {dimension_numbers = #tpu.dot_dimension_numbers<[1], [0], [0], [1], [0, 0, 1, 1], [], []>} : vector<8x128xbf16>, vector<128x64xbf16>, vector<8x64xf32> -> vector<8x64xf32>
    %c19 = arith.constant 19 : index
    %c0_143 = arith.constant 0 : index
    %343 = vector.load %arg6[%c19, %c0_143] : memref<28x64xf32, #tpu.memory_space<vmem>>, vector<1x64xf32>
    %344 = vector.shape_cast %343 : vector<1x64xf32> to vector<64xf32>
    %345 = vector.shape_cast %344 : vector<64xf32> to vector<1x64xf32>
    %346 = vector.broadcast %345 : vector<1x64xf32> to vector<8x64xf32>
    %347 = arith.addf %342, %346 : vector<8x64xf32>
    %348 = arith.addf %327, %347 : vector<8x64xf32>
    %c24 = arith.constant 24 : index
    %c0_144 = arith.constant 0 : index
    %349 = vector.load %arg6[%c24, %c0_144] : memref<28x64xf32, #tpu.memory_space<vmem>>, vector<1x64xf32>
    %350 = vector.shape_cast %349 : vector<1x64xf32> to vector<64xf32>
    %c25 = arith.constant 25 : index
    %c0_145 = arith.constant 0 : index
    %351 = vector.load %arg6[%c25, %c0_145] : memref<28x64xf32, #tpu.memory_space<vmem>>, vector<1x64xf32>
    %352 = vector.shape_cast %351 : vector<1x64xf32> to vector<64xf32>
    %cst_146 = arith.constant dense<0.000000e+00> : vector<8xf32>
    %353 = vector.multi_reduction <add>, %348, %cst_146 [1] : vector<8x64xf32> to vector<8xf32>
    %354 = vector.shape_cast %353 : vector<8xf32> to vector<8x1xf32>
    %cst_147 = arith.constant 6.400000e+01 : f32
    %355 = vector.broadcast %cst_147 : f32 to vector<8x1xf32>
    %356 = arith.divf %354, %355 : vector<8x1xf32>
    %357 = vector.broadcast %356 : vector<8x1xf32> to vector<8x64xf32>
    %358 = arith.subf %348, %357 : vector<8x64xf32>
    %359 = arith.mulf %358, %358 : vector<8x64xf32>
    %cst_148 = arith.constant dense<0.000000e+00> : vector<8xf32>
    %360 = vector.multi_reduction <add>, %359, %cst_148 [1] : vector<8x64xf32> to vector<8xf32>
    %361 = vector.shape_cast %360 : vector<8xf32> to vector<8x1xf32>
    %cst_149 = arith.constant 6.400000e+01 : f32
    %362 = vector.broadcast %cst_149 : f32 to vector<8x1xf32>
    %363 = arith.divf %361, %362 : vector<8x1xf32>
    %cst_150 = arith.constant 9.99999974E-6 : f32
    %364 = vector.broadcast %cst_150 : f32 to vector<8x1xf32>
    %365 = arith.addf %363, %364 : vector<8x1xf32>
    %366 = math.rsqrt %365 : vector<8x1xf32>
    %367 = vector.broadcast %366 : vector<8x1xf32> to vector<8x64xf32>
    %368 = arith.mulf %358, %367 : vector<8x64xf32>
    %369 = vector.shape_cast %350 : vector<64xf32> to vector<1x64xf32>
    %370 = vector.broadcast %369 : vector<1x64xf32> to vector<8x64xf32>
    %371 = arith.mulf %368, %370 : vector<8x64xf32>
    %372 = vector.shape_cast %352 : vector<64xf32> to vector<1x64xf32>
    %373 = vector.broadcast %372 : vector<1x64xf32> to vector<8x64xf32>
    %374 = arith.addf %371, %373 : vector<8x64xf32>
    %c26 = arith.constant 26 : index
    %c0_151 = arith.constant 0 : index
    %375 = vector.load %arg6[%c26, %c0_151] : memref<28x64xf32, #tpu.memory_space<vmem>>, vector<1x64xf32>
    %376 = vector.shape_cast %375 : vector<1x64xf32> to vector<64xf32>
    %c27 = arith.constant 27 : index
    %c0_152 = arith.constant 0 : index
    %377 = vector.load %arg6[%c27, %c0_152] : memref<28x64xf32, #tpu.memory_space<vmem>>, vector<1x64xf32>
    %378 = vector.shape_cast %377 : vector<1x64xf32> to vector<64xf32>
    %cst_153 = arith.constant dense<0.000000e+00> : vector<8xf32>
    %379 = vector.multi_reduction <add>, %374, %cst_153 [1] : vector<8x64xf32> to vector<8xf32>
    %380 = vector.shape_cast %379 : vector<8xf32> to vector<8x1xf32>
    %cst_154 = arith.constant 6.400000e+01 : f32
    %381 = vector.broadcast %cst_154 : f32 to vector<8x1xf32>
    %382 = arith.divf %380, %381 : vector<8x1xf32>
    %383 = vector.broadcast %382 : vector<8x1xf32> to vector<8x64xf32>
    %384 = arith.subf %374, %383 : vector<8x64xf32>
    %385 = arith.mulf %384, %384 : vector<8x64xf32>
    %cst_155 = arith.constant dense<0.000000e+00> : vector<8xf32>
    %386 = vector.multi_reduction <add>, %385, %cst_155 [1] : vector<8x64xf32> to vector<8xf32>
    %387 = vector.shape_cast %386 : vector<8xf32> to vector<8x1xf32>
    %cst_156 = arith.constant 6.400000e+01 : f32
    %388 = vector.broadcast %cst_156 : f32 to vector<8x1xf32>
    %389 = arith.divf %387, %388 : vector<8x1xf32>
    %cst_157 = arith.constant 9.99999974E-6 : f32
    %390 = vector.broadcast %cst_157 : f32 to vector<8x1xf32>
    %391 = arith.addf %389, %390 : vector<8x1xf32>
    %392 = math.rsqrt %391 : vector<8x1xf32>
    %393 = vector.broadcast %392 : vector<8x1xf32> to vector<8x64xf32>
    %394 = arith.mulf %384, %393 : vector<8x64xf32>
    %395 = vector.shape_cast %376 : vector<64xf32> to vector<1x64xf32>
    %396 = vector.broadcast %395 : vector<1x64xf32> to vector<8x64xf32>
    %397 = arith.mulf %394, %396 : vector<8x64xf32>
    %398 = vector.shape_cast %378 : vector<64xf32> to vector<1x64xf32>
    %399 = vector.broadcast %398 : vector<1x64xf32> to vector<8x64xf32>
    %400 = arith.addf %397, %399 : vector<8x64xf32>
    %c0_158 = arith.constant 0 : index
    %c0_159 = arith.constant 0 : index
    %c0_160 = arith.constant 0 : index
    %401 = vector.load %arg9[%c0_158, %c0_159, %c0_160] : memref<1x8x64xf32, #tpu.memory_space<vmem>>, vector<1x8x64xf32>
    %402 = vector.shape_cast %401 : vector<1x8x64xf32> to vector<8x64xf32>
    %403 = vector.shape_cast %400 : vector<8x64xf32> to vector<1x8x64xf32>
    tpu.vector_store %arg9[%c0_158, %c0_159, %c0_160], %403 {strides = array<i32>} : memref<1x8x64xf32, #tpu.memory_space<vmem>>, vector<1x8x64xf32>,
    return
  }
  func.func @transform_0(%arg0: i32) -> (i32, i32, i32) {
    %c0_i32 = arith.constant 0 : i32
    %c0_i32_0 = arith.constant 0 : i32
    %c0_i32_1 = arith.constant 0 : i32
    return %arg0, %c0_i32, %c0_i32_0 : i32, i32, i32
  }
  func.func @transform_1(%arg0: i32) -> (i32, i32, i32) {
    %c0_i32 = arith.constant 0 : i32
    %c0_i32_0 = arith.constant 0 : i32
    %c0_i32_1 = arith.constant 0 : i32
    return %arg0, %c0_i32, %c0_i32_0 : i32, i32, i32
  }
  func.func @transform_2(%arg0: i32) -> (i32, i32, i32) {
    %c0_i32 = arith.constant 0 : i32
    %c0_i32_0 = arith.constant 0 : i32
    %c0_i32_1 = arith.constant 0 : i32
    %c0_i32_2 = arith.constant 0 : i32
    return %c0_i32, %c0_i32_0, %c0_i32_1 : i32, i32, i32
  }
  func.func @transform_3(%arg0: i32) -> (i32, i32, i32) {
    %c0_i32 = arith.constant 0 : i32
    %c0_i32_0 = arith.constant 0 : i32
    %c0_i32_1 = arith.constant 0 : i32
    %c0_i32_2 = arith.constant 0 : i32
    return %c0_i32, %c0_i32_0, %c0_i32_1 : i32, i32, i32
  }
  func.func @transform_4(%arg0: i32) -> (i32, i32, i32) {
    %c0_i32 = arith.constant 0 : i32
    %c0_i32_0 = arith.constant 0 : i32
    %c0_i32_1 = arith.constant 0 : i32
    %c0_i32_2 = arith.constant 0 : i32
    return %c0_i32, %c0_i32_0, %c0_i32_1 : i32, i32, i32
  }
  func.func @transform_5(%arg0: i32) -> (i32, i32) {
    %c0_i32 = arith.constant 0 : i32
    %c0_i32_0 = arith.constant 0 : i32
    %c0_i32_1 = arith.constant 0 : i32
    return %c0_i32, %c0_i32_0 : i32, i32
  }
  func.func @transform_6(%arg0: i32) -> (i32, i32) {
    %c0_i32 = arith.constant 0 : i32
    %c0_i32_0 = arith.constant 0 : i32
    %c0_i32_1 = arith.constant 0 : i32
    return %c0_i32, %c0_i32_0 : i32, i32
  }
  func.func @transform_7(%arg0: i32) -> (i32, i32, i32) {
    %c0_i32 = arith.constant 0 : i32
    %c0_i32_0 = arith.constant 0 : i32
    %c0_i32_1 = arith.constant 0 : i32
    return %arg0, %c0_i32, %c0_i32_0 : i32, i32, i32
  }
  func.func @transform_8(%arg0: i32) -> (i32, i32, i32) {
    %c0_i32 = arith.constant 0 : i32
    %c0_i32_0 = arith.constant 0 : i32
    %c0_i32_1 = arith.constant 0 : i32
    return %arg0, %c0_i32, %c0_i32_0 : i32, i32, i32
  }
}

</mosaic_0001>

<llo_original>
// kernel: hfp_transformer_forward.1
$region0: #{hfp_transformer_forward.1}
  #allocation0 [shape = 'u32[]', space=smem, size = 0x4, offset = 0x4, fixed_abs, tag = 'smem constant byte address 0x4 - core index']
  #allocation1 [shape = 'u32[72,128]{1,0:T(1,128)}', space=vmem, size = 0x9000, scoped, tag = 'internal scratch']
  %s0 = inlined_call_operand.vmem [shape: f32[2,16,64], index: 0, kind: input, shape index: {}]
  %s1 = inlined_call_operand.vmem [shape: f32[2,8,64], index: 1, kind: input, shape index: {}]
  %s2 = inlined_call_operand.vmem [shape: bf16[12,64,64], index: 2, kind: input, shape index: {}]
  %s3 = inlined_call_operand.vmem [shape: bf16[2,64,128], index: 3, kind: input, shape index: {}]
  %s4 = inlined_call_operand.vmem [shape: bf16[2,128,64], index: 4, kind: input, shape index: {}]
  %s5 = inlined_call_operand.vmem [shape: f32[28,64], index: 5, kind: input, shape index: {}]
  %s6 = inlined_call_operand.vmem [shape: f32[2,128], index: 6, kind: input, shape index: {}]
  %s7 = inlined_call_operand.hbm [shape: f32[2,16,64], index: 7, kind: output, shape index: {0}]
  %s8 = inlined_call_operand.hbm [shape: f32[2,8,64], index: 8, kind: output, shape index: {1}]
  %9 = xla_tuple %s7, %s8
  %s10 = sld [smem:[#allocation0]]
  $region69: #{hfp_transformer_forward.1} parent=0
    _
  %s12 = ssub.s32 1, %s10
  %s13 = scalar_select 0, %s12, %s10
  $region1: #{hfp_transformer_forward.1} parent=0
    #allocation2 [shape = 'u8[16384]{0}', space=vmem, size = 0x4000, scoped, tag = 'output window, operand 0']
    #allocation3 [shape = 's32[2]{0}', space=sflag, size = 0x8, scoped, tag = 'scoped memory for hfp_transformer_forward.1']
    #allocation4 [shape = 'u8[8192]{0}', space=vmem, size = 0x2000, scoped, tag = 'output window, operand 1']
    #allocation5 [shape = 's32[2]{0}', space=sflag, size = 0x8, scoped, tag = 'scoped memory for hfp_transformer_forward.1']
    %14 = vsyncpa [#allocation3], 0
    %s15 = scalar_lea.sflag [#allocation3], 1
    %16 = vsyncpa %s15, 0
    %17 = vsyncpa [#allocation5], 0
    %s18 = scalar_lea.sflag [#allocation5], 1
    %19 = vsyncpa %s18, 0
    loop: start=0, step=1, limit=4
    $region2: #{hfp_transformer_forward.1} parent=1 // loop_pre_header
      _
    $region3: #{hfp_transformer_forward.1} parent=1 // loop_header
      %s21 = sphi 0, %s25
      %p22 = scmp.ge.s32.totalorder %s21, 4
      %s31 = sphi 0, %s33
      %s34 = sphi 0, %s31
      %s35 = sphi 0, %s34
      %s51 = sphi 0, %s35
      %s57 = sphi 0, %s59
      %s60 = sphi 0, %s57
      %s61 = sphi 0, %s60
      %s77 = sphi 0, %s61
      %s81 = sphi 0, %s81
      %s83 = sphi 0, %s81
      %s84 = sphi 0, %s83
      %s98 = sphi 0, %s84
      %s102 = sphi 0, %s102
      %s104 = sphi 0, %s102
      %s105 = sphi 0, %s104
      %s119 = sphi 0, %s105
      %s123 = sphi 0, %s123
      %s125 = sphi 0, %s123
      %s126 = sphi 0, %s125
      %s140 = sphi 0, %s126
      %s144 = sphi 0, %s144
      %s146 = sphi 0, %s144
      %s147 = sphi 0, %s146
      %s161 = sphi 0, %s147
      %s165 = sphi 0, %s165
      %s167 = sphi 0, %s165
      %s168 = sphi 0, %s167
      %s182 = sphi 0, %s168
      %s188 = sphi 0, %s190
      %s191 = sphi 0, %s188
      %s192 = sphi 0, %s191
      %s208 = sphi 0, %s192
      %s214 = sphi 0, %s216
      %s217 = sphi 0, %s214
      %s218 = sphi 0, %s217
      %s234 = sphi 0, %s218
    $region4: #{hfp_transformer_forward.1} parent=1 // loop_header_branch
      %24 = sbr.rel (%p22) target = $region8
    $region5: #{hfp_transformer_forward.1} parent=1 // loop_body
      %s26 = ssub.s32 %s21, 1
      %s27 = ssub.s32 %s21, 2
      %s28 = sadd.s32 %s21, 1
      %s29 = ssub.s32 %s21, %s28
      %p30 = scmp.eq.s32.totalorder %s29, 0
      %s32 = sadd.s32 %s31, 1
      %s33 = scalar_select %p30, %s31, %s32
      %p36 = pneg %p30
      %p37 = scmp.eq.s32.totalorder %s21, 1
      %p38 = por %p36, %p37
      %p39 = scmp.ne.s32.totalorder %s31, %s34
      %p40 = scmp.eq.s32.totalorder %s21, 0
      %p41 = por %p39, %p40
      %p42 = scmp.ne.s32.totalorder %s31, %s34
      %p43 = scmp.eq.s32.totalorder %s26, 1
      %p44 = por %p42, %p43
      %p45 = scmp.ne.s32.totalorder %s34, %s35
      %p46 = scmp.eq.s32.totalorder %s26, 0
      %p47 = por %p45, %p46
      %p48 = scmp.ne.s32.totalorder %s34, %s35
      %p49 = scmp.eq.s32.totalorder %s27, 1
      %p50 = por %p48, %p49
      %p52 = scmp.ne.s32.totalorder %s35, %s51
      %p53 = scmp.eq.s32.totalorder %s27, 0
      %p54 = por %p52, %p53
      %s55 = ssub.s32 %s21, %s28
      %p56 = scmp.eq.s32.totalorder %s55, 0
      %s58 = sadd.s32 %s57, 1
      %s59 = scalar_select %p56, %s57, %s58
      %p62 = pneg %p56
      %p63 = scmp.eq.s32.totalorder %s21, 1
      %p64 = por %p62, %p63
      %p65 = scmp.ne.s32.totalorder %s57, %s60
      %p66 = scmp.eq.s32.totalorder %s21, 0
      %p67 = por %p65, %p66
      %p68 = scmp.ne.s32.totalorder %s57, %s60
      %p69 = scmp.eq.s32.totalorder %s26, 1
      %p70 = por %p68, %p69
      %p71 = scmp.ne.s32.totalorder %s60, %s61
      %p72 = scmp.eq.s32.totalorder %s26, 0
      %p73 = por %p71, %p72
      %p74 = scmp.ne.s32.totalorder %s60, %s61
      %p75 = scmp.eq.s32.totalorder %s27, 1
      %p76 = por %p74, %p75
      %p78 = scmp.ne.s32.totalorder %s61, %s77
      %p79 = scmp.eq.s32.totalorder %s27, 0
      %p80 = por %p78, %p79
      %s82 = sadd.s32 %s81, 1
      %p85 = scmp.eq.s32.totalorder %s21, 1
      %p86 = scmp.ne.s32.totalorder %s81, %s83
      %p87 = scmp.eq.s32.totalorder %s21, 0
      %p88 = por %p86, %p87
      %p89 = scmp.ne.s32.totalorder %s81, %s83
      %p90 = scmp.eq.s32.totalorder %s26, 1
      %p91 = por %p89, %p90
      %p92 = scmp.ne.s32.totalorder %s83, %s84
      %p93 = scmp.eq.s32.totalorder %s26, 0
      %p94 = por %p92, %p93
      %p95 = scmp.ne.s32.totalorder %s83, %s84
      %p96 = scmp.eq.s32.totalorder %s27, 1
      %p97 = por %p95, %p96
      %p99 = scmp.ne.s32.totalorder %s84, %s98
      %p100 = scmp.eq.s32.totalorder %s27, 0
      %p101 = por %p99, %p100
      %s103 = sadd.s32 %s102, 1
      %p106 = scmp.eq.s32.totalorder %s21, 1
      %p107 = scmp.ne.s32.totalorder %s102, %s104
      %p108 = scmp.eq.s32.totalorder %s21, 0
      %p109 = por %p107, %p108
      %p110 = scmp.ne.s32.totalorder %s102, %s104
      %p111 = scmp.eq.s32.totalorder %s26, 1
      %p112 = por %p110, %p111
      %p113 = scmp.ne.s32.totalorder %s104, %s105
      %p114 = scmp.eq.s32.totalorder %s26, 0
      %p115 = por %p113, %p114
      %p116 = scmp.ne.s32.totalorder %s104, %s105
      %p117 = scmp.eq.s32.totalorder %s27, 1
      %p118 = por %p116, %p117
      %p120 = scmp.ne.s32.totalorder %s105, %s119
      %p121 = scmp.eq.s32.totalorder %s27, 0
      %p122 = por %p120, %p121
      %s124 = sadd.s32 %s123, 1
      %p127 = scmp.eq.s32.totalorder %s21, 1
      %p128 = scmp.ne.s32.totalorder %s123, %s125
      %p129 = scmp.eq.s32.totalorder %s21, 0
      %p130 = por %p128, %p129
      %p131 = scmp.ne.s32.totalorder %s123, %s125
      %p132 = scmp.eq.s32.totalorder %s26, 1
      %p133 = por %p131, %p132
      %p134 = scmp.ne.s32.totalorder %s125, %s126
      %p135 = scmp.eq.s32.totalorder %s26, 0
      %p136 = por %p134, %p135
      %p137 = scmp.ne.s32.totalorder %s125, %s126
      %p138 = scmp.eq.s32.totalorder %s27, 1
      %p139 = por %p137, %p138
      %p141 = scmp.ne.s32.totalorder %s126, %s140
      %p142 = scmp.eq.s32.totalorder %s27, 0
      %p143 = por %p141, %p142
      %s145 = sadd.s32 %s144, 1
      %p148 = scmp.eq.s32.totalorder %s21, 1
      %p149 = scmp.ne.s32.totalorder %s144, %s146
      %p150 = scmp.eq.s32.totalorder %s21, 0
      %p151 = por %p149, %p150
      %p152 = scmp.ne.s32.totalorder %s144, %s146
      %p153 = scmp.eq.s32.totalorder %s26, 1
      %p154 = por %p152, %p153
      %p155 = scmp.ne.s32.totalorder %s146, %s147
      %p156 = scmp.eq.s32.totalorder %s26, 0
      %p157 = por %p155, %p156
      %p158 = scmp.ne.s32.totalorder %s146, %s147
      %p159 = scmp.eq.s32.totalorder %s27, 1
      %p160 = por %p158, %p159
      %p162 = scmp.ne.s32.totalorder %s147, %s161
      %p163 = scmp.eq.s32.totalorder %s27, 0
      %p164 = por %p162, %p163
      %s166 = sadd.s32 %s165, 1
      %p169 = scmp.eq.s32.totalorder %s21, 1
      %p170 = scmp.ne.s32.totalorder %s165, %s167
      %p171 = scmp.eq.s32.totalorder %s21, 0
      %p172 = por %p170, %p171
      %p173 = scmp.ne.s32.totalorder %s165, %s167
      %p174 = scmp.eq.s32.totalorder %s26, 1
      %p175 = por %p173, %p174
      %p176 = scmp.ne.s32.totalorder %s167, %s168
      %p177 = scmp.eq.s32.totalorder %s26, 0
      %p178 = por %p176, %p177
      %p179 = scmp.ne.s32.totalorder %s167, %s168
      %p180 = scmp.eq.s32.totalorder %s27, 1
      %p181 = por %p179, %p180
      %p183 = scmp.ne.s32.totalorder %s168, %s182
      %p184 = scmp.eq.s32.totalorder %s27, 0
      %p185 = por %p183, %p184
      %s186 = ssub.s32 %s21, %s28
      %p187 = scmp.eq.s32.totalorder %s186, 0
      %s189 = sadd.s32 %s188, 1
      %s190 = scalar_select %p187, %s188, %s189
      %p193 = pneg %p187
      %p194 = scmp.eq.s32.totalorder %s21, 1
      %p195 = por %p193, %p194
      %p196 = scmp.ne.s32.totalorder %s188, %s191
      %p197 = scmp.eq.s32.totalorder %s21, 0
      %p198 = por %p196, %p197
      %p199 = scmp.ne.s32.totalorder %s188, %s191
      %p200 = scmp.eq.s32.totalorder %s26, 1
      %p201 = por %p199, %p200
      %p202 = scmp.ne.s32.totalorder %s191, %s192
      %p203 = scmp.eq.s32.totalorder %s26, 0
      %p204 = por %p202, %p203
      %p205 = scmp.ne.s32.totalorder %s191, %s192
      %p206 = scmp.eq.s32.totalorder %s27, 1
      %p207 = por %p205, %p206
      %p209 = scmp.ne.s32.totalorder %s192, %s208
      %p210 = scmp.eq.s32.totalorder %s27, 0
      %p211 = por %p209, %p210
      %s212 = ssub.s32 %s21, %s28
      %p213 = scmp.eq.s32.totalorder %s212, 0
      %s215 = sadd.s32 %s214, 1
      %s216 = scalar_select %p213, %s214, %s215
      %p219 = pneg %p213
      %p220 = scmp.eq.s32.totalorder %s21, 1
      %p221 = por %p219, %p220
      %p222 = scmp.ne.s32.totalorder %s214, %s217
      %p223 = scmp.eq.s32.totalorder %s21, 0
      %p224 = por %p222, %p223
      %p225 = scmp.ne.s32.totalorder %s214, %s217
      %p226 = scmp.eq.s32.totalorder %s26, 1
      %p227 = por %p225, %p226
      %p228 = scmp.ne.s32.totalorder %s217, %s218
      %p229 = scmp.eq.s32.totalorder %s26, 0
      %p230 = por %p228, %p229
      %p231 = scmp.ne.s32.totalorder %s217, %s218
      %p232 = scmp.eq.s32.totalorder %s27, 1
      %p233 = por %p231, %p232
      %p235 = scmp.ne.s32.totalorder %s218, %s234
      %p236 = scmp.eq.s32.totalorder %s27, 0
      %p237 = por %p235, %p236
      %p238 = scmp.le.s32.totalorder 1, %s21
      %p239 = scmp.lt.s32.totalorder %s21, 3
      %p240 = pnand %p238, %p239
      %p241 = pneg %p240
      // Predicated region
      $region9: #{hfp_transformer_forward.1} parent=5 // pred_check
        _
      $region10: #{hfp_transformer_forward.1} parent=5 // pred_check_branch
        %243 = sbr.rel (%p240) target = $region12
      $region11: #{hfp_transformer_forward.1} parent=5 // pred_region
        %s244 = ssub.s32 %s21, 1
        // Predicated region
        $region13: #{hfp_transformer_forward.1} parent=11 // pred_check
          %p245 = pneg %p94
        $region14: #{hfp_transformer_forward.1} parent=11 // pred_check_branch
          %247 = sbr.rel (%p245) target = $region16
        $region15: #{hfp_transformer_forward.1} parent=11 // pred_region
          _
        $region16: #{hfp_transformer_forward.1} parent=11 // pred_fallthru
          _
        // Predicated region
        $region17: #{hfp_transformer_forward.1} parent=11 // pred_check
          %p248 = pneg %p115
        $region18: #{hfp_transformer_forward.1} parent=11 // pred_check_branch
          %250 = sbr.rel (%p248) target = $region20
        $region19: #{hfp_transformer_forward.1} parent=11 // pred_region
          _
        $region20: #{hfp_transformer_forward.1} parent=11 // pred_fallthru
          _
        // Predicated region
        $region21: #{hfp_transformer_forward.1} parent=11 // pred_check
          %p251 = pneg %p136
        $region22: #{hfp_transformer_forward.1} parent=11 // pred_check_branch
          %253 = sbr.rel (%p251) target = $region24
        $region23: #{hfp_transformer_forward.1} parent=11 // pred_region
          _
        $region24: #{hfp_transformer_forward.1} parent=11 // pred_fallthru
          _
        // Predicated region
        $region25: #{hfp_transformer_forward.1} parent=11 // pred_check
          %p254 = pneg %p157
        $region26: #{hfp_transformer_forward.1} parent=11 // pred_check_branch
          %256 = sbr.rel (%p254) target = $region28
        $region27: #{hfp_transformer_forward.1} parent=11 // pred_region
          _
        $region28: #{hfp_transformer_forward.1} parent=11 // pred_fallthru
          _
        // Predicated region
        $region29: #{hfp_transformer_forward.1} parent=11 // pred_check
          %p257 = pneg %p178
        $region30: #{hfp_transformer_forward.1} parent=11 // pred_check_branch
          %259 = sbr.rel (%p257) target = $region32
        $region31: #{hfp_transformer_forward.1} parent=11 // pred_region
          _
        $region32: #{hfp_transformer_forward.1} parent=11 // pred_fallthru
          _
      $region12: #{hfp_transformer_forward.1} parent=5 // pred_fallthru
        _
      %p260 = scmp.lt.s32.totalorder %s21, 2
      // Predicated region
      $region33: #{hfp_transformer_forward.1} parent=5 // pred_check
        %p261 = pneg %p260
      $region34: #{hfp_transformer_forward.1} parent=5 // pred_check_branch
        %263 = sbr.rel (%p261) target = $region36
      $region35: #{hfp_transformer_forward.1} parent=5 // pred_region
        // Predicated region
        $region37: #{hfp_transformer_forward.1} parent=35 // pred_check
          %p264 = pneg %p41
        $region38: #{hfp_transformer_forward.1} parent=35 // pred_check_branch
          %266 = sbr.rel (%p264) target = $region40
        $region39: #{hfp_transformer_forward.1} parent=35 // pred_region
          %p267 = scmp.lt.s32.totalorder %s21, 1
          %s268 = scalar_select %p267, %s21, 1
          %s269 = smul.addr %s268, 2
          %s270 = smul.addr %s269, 8
          %s271 = scalar_lea.vmem %s0, %s270
        $region40: #{hfp_transformer_forward.1} parent=35 // pred_fallthru
          _
        // Predicated region
        $region41: #{hfp_transformer_forward.1} parent=35 // pred_check
          %p272 = pneg %p67
        $region42: #{hfp_transformer_forward.1} parent=35 // pred_check_branch
          %274 = sbr.rel (%p272) target = $region44
        $region43: #{hfp_transformer_forward.1} parent=35 // pred_region
          %p275 = scmp.lt.s32.totalorder %s21, 1
          %s276 = scalar_select %p275, %s21, 1
          %s277 = smul.addr %s276, 8
          %s278 = scalar_lea.vmem %s1, %s277
        $region44: #{hfp_transformer_forward.1} parent=35 // pred_fallthru
          _
      $region36: #{hfp_transformer_forward.1} parent=5 // pred_fallthru
        _
      %p279 = scmp.le.s32.totalorder 1, %s21
      %p280 = scmp.lt.s32.totalorder %s21, 3
      %p281 = pnand %p279, %p280
      %p282 = pneg %p281
      // Predicated region
      $region45: #{hfp_transformer_forward.1} parent=5 // pred_check
        _
      $region46: #{hfp_transformer_forward.1} parent=5 // pred_check_branch
        %284 = sbr.rel (%p281) target = $region48
      $region47: #{hfp_transformer_forward.1} parent=5 // pred_region
        %s285 = ssub.s32 %s21, 1
        %p286 = scmp.lt.s32.totalorder %s26, 1
        %s287 = scalar_select %p286, %s26, 1
        %s288 = smul.addr %s287, 2
        %s289 = smul.addr %s288, 8
        %s290 = scalar_lea.vmem %s0, %s289
        %p291 = pneg %p47
        %p292 = pneg %p44
        %p293 = scmp.lt.s32.totalorder %s26, 1
        %s294 = scalar_select %p293, %s26, 1
        %s295 = smul.addr %s294, 8
        %s296 = scalar_lea.vmem %s1, %s295
        %p297 = pneg %p73
        %p298 = pneg %p70
        %p299 = pneg %p94
        %p300 = pneg %p91
        %p301 = pneg %p115
        %p302 = pneg %p112
        %p303 = pneg %p136
        %p304 = pneg %p133
        %p305 = pneg %p157
        %p306 = pneg %p154
        %p307 = pneg %p178
        %p308 = pneg %p175
        %p309 = pneg %p204
        %p310 = pneg %p201
        %s311 = sand.u32 %s191, 1
        %s312 = scalar_lea.sflag [#allocation3], %s311
        %s313 = sand.u32 %s191, 1
        %s314 = smul.addr %s313, 16
        %s315 = scalar_lea.vmem [#allocation2], %s314
        %p316 = pneg %p230
        %p317 = pneg %p227
        %s318 = sand.u32 %s217, 1
        %s319 = scalar_lea.sflag [#allocation5], %s318
        %s320 = sand.u32 %s217, 1
        %s321 = smul.addr %s320, 8
        %s322 = scalar_lea.vmem [#allocation4], %s321
        %p323 = scmp.lt.s32.totalorder %s26, 1
        %s324 = scalar_select %p323, %s26, 1
        %s325 = smul.addr %s324, 2
        %s326 = smul.addr %s325, 8
        %s327 = scalar_lea.vmem %s0, %s326
        %p328 = scmp.lt.s32.totalorder %s26, 1
        %s329 = scalar_select %p328, %s26, 1
        %s330 = smul.addr %s329, 8
        %s331 = scalar_lea.vmem %s1, %s330
        %v333 = vlaneseq
        %v334 = vshrl.u32 %v333, 7
        %v335 = vadd.s32 %v334, 8
        %v336 = vlaneseq
        %v337 = vand.u32 %v336, 127
        %vm338 = vcmp.le.s32.totalorder %v337, %v334
        %vm339 = vcmp.le.s32.totalorder %v337, %v335
        %v340 = vld [vmem:[%s327] sm:$0xff]
        %v341 = vld [vmem:[%s327 + $0x8] sm:$0xff]
        %v342 = vpack.c.bf16 %v341, %v340
        %v343 = vld [vmem:[%s2] sm:$0xf]
        %v344 = vld [vmem:[%s2 + $0x4] sm:$0xf]
        %v345 = vld [vmem:[%s2 + $0x8] sm:$0xf]
        %v346 = vld [vmem:[%s2 + $0xc] sm:$0xf]
        %v347 = vld [vmem:[%s2 + $0x10] sm:$0xf]
        %v348 = vld [vmem:[%s2 + $0x14] sm:$0xf]
        %v349 = vld [vmem:[%s2 + $0x18] sm:$0xf]
        %v350 = vld [vmem:[%s2 + $0x1c] sm:$0xf]
        %v351 = vld [vmem:[%s5] sm:$0x1]
        %v352 = vperm.slane %v351, 0
        %v361 = vunpack.c.l.b16 %v343
        %v362 = vunpack.c.l.b16 %v344
        %v363 = vunpack.c.l.b16 %v345
        %v364 = vunpack.c.l.b16 %v346
        %v365 = vunpack.c.l.b16 %v347
        %v366 = vunpack.c.l.b16 %v348
        %v367 = vunpack.c.l.b16 %v349
        %v368 = vunpack.c.l.b16 %v350
        %v369 = vpack.c.b16 %v362, %v361
        %v370 = vpack.c.b16 %v364, %v363
        %v371 = vpack.c.b16 %v366, %v365
        %v372 = vpack.c.b16 %v368, %v367
        %vm377 = vcmask 523264
        %v379 = vsel %vm377, %v342, 0
        %381 = vmatpush.bf16.msra.mxu0 0
        %382 = vmatpush.bf16.msra.mxu0 0
        %383 = vmatpush.bf16.msra.mxu0 0
        %384 = vmatpush.bf16.msra.mxu0 0
        %385 = vmatpush.bf16.msra.mxu0 %v372
        %386 = vmatpush.bf16.msra.mxu0 %v371
        %387 = vmatpush.bf16.msra.mxu0 %v370
        %388 = vmatpush.bf16.msra.mxu0 %v369
        %389 = vmatmul.bf16.gmra.mxu0 %v379
        %v390 = vpop.f32.mrf.mxu0
        %v391 = vadd.f32 %v352, %v390
        %v392 = vpop.f32.mrf.mxu0
        %v393 = vadd.f32 %v352, %v392
        %394 = vdwg.mxu0
        %s395 = scalar_lea.vmem %s2, 32
        %v396 = vld [vmem:[%s395] sm:$0xf]
        %v397 = vld [vmem:[%s395 + $0x4] sm:$0xf]
        %v398 = vld [vmem:[%s395 + $0x8] sm:$0xf]
        %v399 = vld [vmem:[%s395 + $0xc] sm:$0xf]
        %v400 = vld [vmem:[%s395 + $0x10] sm:$0xf]
        %v401 = vld [vmem:[%s395 + $0x14] sm:$0xf]
        %v402 = vld [vmem:[%s395 + $0x18] sm:$0xf]
        %v403 = vld [vmem:[%s395 + $0x1c] sm:$0xf]
        %v404 = vld [vmem:[%s5 + $0x1] sm:$0x1]
        %v405 = vperm.slane %v404, 0
        %v414 = vunpack.c.l.b16 %v396
        %v415 = vunpack.c.l.b16 %v397
        %v416 = vunpack.c.l.b16 %v398
        %v417 = vunpack.c.l.b16 %v399
        %v418 = vunpack.c.l.b16 %v400
        %v419 = vunpack.c.l.b16 %v401
        %v420 = vunpack.c.l.b16 %v402
        %v421 = vunpack.c.l.b16 %v403
        %v422 = vpack.c.b16 %v415, %v414
        %v423 = vpack.c.b16 %v417, %v416
        %v424 = vpack.c.b16 %v419, %v418
        %v425 = vpack.c.b16 %v421, %v420
        %430 = vmatpush.bf16.msra.mxu0 0
        %431 = vmatpush.bf16.msra.mxu0 0
        %432 = vmatpush.bf16.msra.mxu0 0
        %433 = vmatpush.bf16.msra.mxu0 0
        %434 = vmatpush.bf16.msra.mxu0 %v425
        %435 = vmatpush.bf16.msra.mxu0 %v424
        %436 = vmatpush.bf16.msra.mxu0 %v423
        %437 = vmatpush.bf16.msra.mxu0 %v422
        %438 = vmatmul.bf16.gmra.mxu0 %v379
        %v439 = vpop.f32.mrf.mxu0
        %v440 = vadd.f32 %v405, %v439
        %v441 = vpop.f32.mrf.mxu0
        %v442 = vadd.f32 %v405, %v441
        %443 = vdwg.mxu0
        %s444 = scalar_lea.vmem %s2, 64
        %v445 = vld [vmem:[%s444] sm:$0xf]
        %v446 = vld [vmem:[%s444 + $0x4] sm:$0xf]
        %v447 = vld [vmem:[%s444 + $0x8] sm:$0xf]
        %v448 = vld [vmem:[%s444 + $0xc] sm:$0xf]
        %v449 = vld [vmem:[%s444 + $0x10] sm:$0xf]
        %v450 = vld [vmem:[%s444 + $0x14] sm:$0xf]
        %v451 = vld [vmem:[%s444 + $0x18] sm:$0xf]
        %v452 = vld [vmem:[%s444 + $0x1c] sm:$0xf]
        %v453 = vld [vmem:[%s5 + $0x2] sm:$0x1]
        %v454 = vperm.slane %v453, 0
        %v463 = vunpack.c.l.b16 %v445
        %v464 = vunpack.c.l.b16 %v446
        %v465 = vunpack.c.l.b16 %v447
        %v466 = vunpack.c.l.b16 %v448
        %v467 = vunpack.c.l.b16 %v449
        %v468 = vunpack.c.l.b16 %v450
        %v469 = vunpack.c.l.b16 %v451
        %v470 = vunpack.c.l.b16 %v452
        %v471 = vpack.c.b16 %v464, %v463
        %v472 = vpack.c.b16 %v466, %v465
        %v473 = vpack.c.b16 %v468, %v467
        %v474 = vpack.c.b16 %v470, %v469
        %479 = vmatpush.bf16.msra.mxu0 0
        %480 = vmatpush.bf16.msra.mxu0 0
        %481 = vmatpush.bf16.msra.mxu0 0
        %482 = vmatpush.bf16.msra.mxu0 0
        %483 = vmatpush.bf16.msra.mxu0 %v474
        %484 = vmatpush.bf16.msra.mxu0 %v473
        %485 = vmatpush.bf16.msra.mxu0 %v472
        %486 = vmatpush.bf16.msra.mxu0 %v471
        %487 = vmatmul.bf16.gmra.mxu0 %v379
        %v488 = vpop.f32.mrf.mxu0
        %v489 = vadd.f32 %v454, %v488
        %v490 = vpop.f32.mrf.mxu0
        %v491 = vadd.f32 %v454, %v490
        %492 = vdwg.mxu0
        %v493 = vpack.c.bf16 %v393, %v391
        %v494 = vpack.c.bf16 %v442, %v440
        %v496 = vsel %vm377, %v493, 0
        %v499 = vsel %vm377, %v494, 0
        %501 = vmatpush.bf16.xpose.msra.mxu0 0
        %502 = vmatpush.bf16.xpose.msra.mxu0 0
        %503 = vmatpush.bf16.xpose.msra.mxu0 0
        %504 = vmatpush.bf16.xpose.msra.mxu0 0
        %505 = vmatpush.bf16.xpose.msra.mxu0 0
        %506 = vmatpush.bf16.xpose.msra.mxu0 0
        %507 = vmatpush.bf16.xpose.msra.mxu0 0
        %508 = vmatpush.bf16.xpose.msra.mxu0 %v499
        %509 = vmatmul.bf16.gmra.mxu0 %v496
        %v510 = vpop.f32.mrf.mxu0
        %v511 = vadd.f32 0.0, %v510
        %v512 = vpop.f32.mrf.mxu0
        %v513 = vadd.f32 0.0, %v512
        %514 = vdwg.mxu0
        %v515 = vmul.f32 %v511, 0.125
        %v516 = vmul.f32 %v513, 0.125
        %v517 = vsel %vm338, %v515, -1e+30
        %v518 = vsel %vm339, %v516, -1e+30
        %vm519 = vcmask 130048
        %v520 = vsel %vm519, %v517, -inf
        %521 = vmax.xlane.f32.xlu0 %v520
        %v522 = vpop.xlane.xlu0 %521
        %v523 = vsel %vm519, %v518, -inf
        %524 = vmax.xlane.f32.xlu0 %v523
        %v525 = vpop.xlane.xlu0 %524
        %v526 = vsub.f32 %v517, %v522
        %v527 = vsub.f32 %v518, %v525
        %v528 = vmul.f32 %v526, 1.442695
        %v529 = vpow.pop %v528
        %v530 = vmul.f32 %v527, 1.442695
        %v531 = vpow.pop %v530
        %v532 = vsel %vm519, %v529, 0.0
        %533 = vadd.xlane.f32.xlu0 %v532
        %v534 = vpop.xlane.xlu0 %533
        %v535 = vsel %vm519, %v531, 0.0
        %536 = vadd.xlane.f32.xlu0 %v535
        %v537 = vpop.xlane.xlu0 %536
        %v538 = vrcp.pop %v534
        %v539 = vmul.f32 %v534, %v538
        %v540 = vsub.f32 1.0, %v539
        %v541 = vmul.f32 %v538, %v540
        %v542 = vadd.f32 %v538, %v541
        %vm543 = vweird.f32 %v534
        %vm544 = vweird.f32 %v538
        %vm545 = vmor %vm543, %vm544
        %v546 = vsel %vm545, %v538, %v542
        %v547 = vand.u32 2147483647, %v534
        %vm548 = vcmp.eq.f32.partialorder %v547, 8.507059e+37
        %v549 = vand.u32 %v534, 2147483648
        %v550 = vor.u32 1.1754944e-38, %v549
        %v551 = vsel %vm548, %v550, %v546
        %v552 = vrcp.pop %v537
        %v553 = vmul.f32 %v537, %v552
        %v554 = vsub.f32 1.0, %v553
        %v555 = vmul.f32 %v552, %v554
        %v556 = vadd.f32 %v552, %v555
        %vm557 = vweird.f32 %v537
        %vm558 = vweird.f32 %v552
        %vm559 = vmor %vm557, %vm558
        %v560 = vsel %vm559, %v552, %v556
        %v561 = vand.u32 2147483647, %v537
        %vm562 = vcmp.eq.f32.partialorder %v561, 8.507059e+37
        %v563 = vand.u32 %v537, 2147483648
        %v564 = vor.u32 1.1754944e-38, %v563
        %v565 = vsel %vm562, %v564, %v560
        %v566 = vmul.f32 %v529, %v551
        %v567 = vmul.f32 %v531, %v565
        %v568 = vpack.c.bf16 %v567, %v566
        %v569 = vpack.c.bf16 %v491, %v489
        %v571 = vsel %vm519, %v568, 0
        %573 = vmatpush.bf16.msra.mxu0 0
        %574 = vmatpush.bf16.msra.mxu0 0
        %575 = vmatpush.bf16.msra.mxu0 0
        %576 = vmatpush.bf16.msra.mxu0 0
        %577 = vmatpush.bf16.msra.mxu0 0
        %578 = vmatpush.bf16.msra.mxu0 0
        %579 = vmatpush.bf16.msra.mxu0 0
        %580 = vmatpush.bf16.msra.mxu0 %v569
        %581 = vmatmul.bf16.gmra.mxu0 %v571
        %v582 = vpop.f32.mrf.mxu0
        %v583 = vadd.f32 0.0, %v582
        %v584 = vpop.f32.mrf.mxu0
        %v585 = vadd.f32 0.0, %v584
        %586 = vdwg.mxu0
        %v587 = vpack.c.bf16 %v585, %v583
        %s588 = scalar_lea.vmem %s2, 96
        %v589 = vld [vmem:[%s588] sm:$0xf]
        %v590 = vld [vmem:[%s588 + $0x4] sm:$0xf]
        %v591 = vld [vmem:[%s588 + $0x8] sm:$0xf]
        %v592 = vld [vmem:[%s588 + $0xc] sm:$0xf]
        %v593 = vld [vmem:[%s588 + $0x10] sm:$0xf]
        %v594 = vld [vmem:[%s588 + $0x14] sm:$0xf]
        %v595 = vld [vmem:[%s588 + $0x18] sm:$0xf]
        %v596 = vld [vmem:[%s588 + $0x1c] sm:$0xf]
        %v597 = vld [vmem:[%s5 + $0x3] sm:$0x1]
        %v598 = vperm.slane %v597, 0
        %v607 = vunpack.c.l.b16 %v589
        %v608 = vunpack.c.l.b16 %v590
        %v609 = vunpack.c.l.b16 %v591
        %v610 = vunpack.c.l.b16 %v592
        %v611 = vunpack.c.l.b16 %v593
        %v612 = vunpack.c.l.b16 %v594
        %v613 = vunpack.c.l.b16 %v595
        %v614 = vunpack.c.l.b16 %v596
        %v615 = vpack.c.b16 %v608, %v607
        %v616 = vpack.c.b16 %v610, %v609
        %v617 = vpack.c.b16 %v612, %v611
        %v618 = vpack.c.b16 %v614, %v613
        %v624 = vsel %vm377, %v587, 0
        %626 = vmatpush.bf16.msra.mxu0 0
        %627 = vmatpush.bf16.msra.mxu0 0
        %628 = vmatpush.bf16.msra.mxu0 0
        %629 = vmatpush.bf16.msra.mxu0 0
        %630 = vmatpush.bf16.msra.mxu0 %v618
        %631 = vmatpush.bf16.msra.mxu0 %v617
        %632 = vmatpush.bf16.msra.mxu0 %v616
        %633 = vmatpush.bf16.msra.mxu0 %v615
        %634 = vmatmul.bf16.gmra.mxu0 %v624
        %v635 = vpop.f32.mrf.mxu0
        %v636 = vadd.f32 %v598, %v635
        %v637 = vpop.f32.mrf.mxu0
        %v638 = vadd.f32 %v598, %v637
        %639 = vdwg.mxu0
        %v640 = vadd.f32 %v340, %v636
        %v641 = vadd.f32 %v341, %v638
        %v642 = vld [vmem:[%s5 + $0x5] sm:$0x1]
        %v643 = vld [vmem:[%s5 + $0x6] sm:$0x1]
        %v644 = vsel %vm377, %v640, 0.0
        %645 = vadd.xlane.f32.xlu0 %v644
        %v646 = vpop.xlane.xlu0 %645
        %v647 = vsel %vm377, %v641, 0.0
        %648 = vadd.xlane.f32.xlu0 %v647
        %v649 = vpop.xlane.xlu0 %648
        %v650 = vrcp.pop 64.0
        %v651 = vmul.f32 64.0, %v650
        %v652 = vsub.f32 1.0, %v651
        %v653 = vmul.f32 %v650, %v652
        %v654 = vadd.f32 %v650, %v653
        %vm655 = vweird.f32 %v650
        %v656 = vsel %vm655, %v650, %v654
        %v657 = vmul.f32 %v646, %v656
        %v658 = vmul.f32 %v649, %v656
        %v659 = vsub.f32 %v640, %v657
        %v660 = vsub.f32 %v641, %v658
        %v661 = vmul.f32 %v659, %v659
        %v662 = vmul.f32 %v660, %v660
        %v663 = vsel %vm377, %v661, 0.0
        %664 = vadd.xlane.f32.xlu0 %v663
        %v665 = vpop.xlane.xlu0 %664
        %v666 = vsel %vm377, %v662, 0.0
        %667 = vadd.xlane.f32.xlu0 %v666
        %v668 = vpop.xlane.xlu0 %667
        %v669 = vmul.f32 %v665, %v656
        %v670 = vmul.f32 %v668, %v656
        %v671 = vadd.f32 %v669, 1e-05
        %v672 = vadd.f32 %v670, 1e-05
        %v673 = vrsqrt.pop %v671
        %v674 = vmul.f32 %v673, %v671
        %v675 = vmul.f32 %v674, %v673
        %v676 = vmul.f32 0.5, %v675
        %v677 = vsub.f32 1.5, %v676
        %v678 = vmul.f32 %v673, %v677
        %vm679 = vweird.f32 %v671
        %vm680 = vweird.f32 %v673
        %vm681 = vmor %vm679, %vm680
        %v682 = vsel %vm681, %v673, %v678
        %v683 = vrsqrt.pop %v672
        %v684 = vmul.f32 %v683, %v672
        %v685 = vmul.f32 %v684, %v683
        %v686 = vmul.f32 0.5, %v685
        %v687 = vsub.f32 1.5, %v686
        %v688 = vmul.f32 %v683, %v687
        %vm689 = vweird.f32 %v672
        %vm690 = vweird.f32 %v683
        %vm691 = vmor %vm689, %vm690
        %v692 = vsel %vm691, %v683, %v688
        %v693 = vmul.f32 %v659, %v682
        %v694 = vmul.f32 %v660, %v692
        %v695 = vperm.slane %v642, 0
        %v696 = vmul.f32 %v693, %v695
        %v697 = vmul.f32 %v694, %v695
        %v698 = vperm.slane %v643, 0
        %v699 = vadd.f32 %v696, %v698
        %v700 = vadd.f32 %v697, %v698
        %v701 = vpack.c.bf16 %v700, %v699
        %v702 = vld [vmem:[%s3] sm:$0xf]
        %v703 = vld [vmem:[%s3 + $0x4] sm:$0xf]
        %v704 = vld [vmem:[%s3 + $0x8] sm:$0xf]
        %v705 = vld [vmem:[%s3 + $0xc] sm:$0xf]
        %v706 = vld [vmem:[%s3 + $0x10] sm:$0xf]
        %v707 = vld [vmem:[%s3 + $0x14] sm:$0xf]
        %v708 = vld [vmem:[%s3 + $0x18] sm:$0xf]
        %v709 = vld [vmem:[%s3 + $0x1c] sm:$0xf]
        %v710 = vld [vmem:[%s6] sm:$0x1]
        %v711 = vperm.slane %v710, 0
        %v720 = vunpack.c.l.b16 %v702
        %v721 = vunpack.c.l.b16 %v703
        %v722 = vunpack.c.l.b16 %v704
        %v723 = vunpack.c.l.b16 %v705
        %v724 = vunpack.c.l.b16 %v706
        %v725 = vunpack.c.l.b16 %v707
        %v726 = vunpack.c.l.b16 %v708
        %v727 = vunpack.c.l.b16 %v709
        %v728 = vpack.c.b16 %v721, %v720
        %v729 = vpack.c.b16 %v723, %v722
        %v730 = vpack.c.b16 %v725, %v724
        %v731 = vpack.c.b16 %v727, %v726
        %v737 = vsel %vm377, %v701, 0
        %739 = vmatpush.bf16.msra.mxu0 0
        %740 = vmatpush.bf16.msra.mxu0 0
        %741 = vmatpush.bf16.msra.mxu0 0
        %742 = vmatpush.bf16.msra.mxu0 0
        %743 = vmatpush.bf16.msra.mxu0 %v731
        %744 = vmatpush.bf16.msra.mxu0 %v730
        %745 = vmatpush.bf16.msra.mxu0 %v729
        %746 = vmatpush.bf16.msra.mxu0 %v728
        %747 = vmatmul.bf16.gmra.mxu0 %v737
        %v748 = vpop.f32.mrf.mxu0
        %v749 = vadd.f32 %v711, %v748
        %v750 = vpop.f32.mrf.mxu0
        %v751 = vadd.f32 %v711, %v750
        %752 = vdwg.mxu0
        %v753 = vmax.f32 %v749, 0.0
        %v754 = vmax.f32 %v751, 0.0
        %v755 = vpack.c.bf16 %v754, %v753
        %v756 = vld [vmem:[%s4] sm:$0xf]
        %v757 = vld [vmem:[%s4 + $0x4] sm:$0xf]
        %v758 = vld [vmem:[%s4 + $0x8] sm:$0xf]
        %v759 = vld [vmem:[%s4 + $0xc] sm:$0xf]
        %v760 = vld [vmem:[%s4 + $0x10] sm:$0xf]
        %v761 = vld [vmem:[%s4 + $0x14] sm:$0xf]
        %v762 = vld [vmem:[%s4 + $0x18] sm:$0xf]
        %v763 = vld [vmem:[%s4 + $0x1c] sm:$0xf]
        %v764 = vld [vmem:[%s4 + $0x20] sm:$0xf]
        %v765 = vld [vmem:[%s4 + $0x24] sm:$0xf]
        %v766 = vld [vmem:[%s4 + $0x28] sm:$0xf]
        %v767 = vld [vmem:[%s4 + $0x2c] sm:$0xf]
        %v768 = vld [vmem:[%s4 + $0x30] sm:$0xf]
        %v769 = vld [vmem:[%s4 + $0x34] sm:$0xf]
        %v770 = vld [vmem:[%s4 + $0x38] sm:$0xf]
        %v771 = vld [vmem:[%s4 + $0x3c] sm:$0xf]
        %v772 = vld [vmem:[%s5 + $0x4] sm:$0x1]
        %v773 = vperm.slane %v772, 0
        %v790 = vunpack.c.l.b16 %v756
        %v791 = vunpack.c.l.b16 %v757
        %v792 = vunpack.c.l.b16 %v758
        %v793 = vunpack.c.l.b16 %v759
        %v794 = vunpack.c.l.b16 %v760
        %v795 = vunpack.c.l.b16 %v761
        %v796 = vunpack.c.l.b16 %v762
        %v797 = vunpack.c.l.b16 %v763
        %v798 = vunpack.c.l.b16 %v764
        %v799 = vunpack.c.l.b16 %v765
        %v800 = vunpack.c.l.b16 %v766
        %v801 = vunpack.c.l.b16 %v767
        %v802 = vunpack.c.l.b16 %v768
        %v803 = vunpack.c.l.b16 %v769
        %v804 = vunpack.c.l.b16 %v770
        %v805 = vunpack.c.l.b16 %v771
        %v806 = vpack.c.b16 %v791, %v790
        %v807 = vpack.c.b16 %v793, %v792
        %v808 = vpack.c.b16 %v795, %v794
        %v809 = vpack.c.b16 %v797, %v796
        %v810 = vpack.c.b16 %v799, %v798
        %v811 = vpack.c.b16 %v801, %v800
        %v812 = vpack.c.b16 %v803, %v802
        %v813 = vpack.c.b16 %v805, %v804
        %822 = vmatpush.bf16.msra.mxu0 %v813
        %823 = vmatpush.bf16.msra.mxu0 %v812
        %824 = vmatpush.bf16.msra.mxu0 %v811
        %825 = vmatpush.bf16.msra.mxu0 %v810
        %826 = vmatpush.bf16.msra.mxu0 %v809
        %827 = vmatpush.bf16.msra.mxu0 %v808
        %828 = vmatpush.bf16.msra.mxu0 %v807
        %829 = vmatpush.bf16.msra.mxu0 %v806
        %830 = vmatmul.bf16.gmra.mxu0 %v755
        %v831 = vpop.f32.mrf.mxu0
        %v832 = vadd.f32 %v773, %v831
        %v833 = vpop.f32.mrf.mxu0
        %v834 = vadd.f32 %v773, %v833
        %835 = vdwg.mxu0
        %v836 = vadd.f32 %v699, %v832
        %v837 = vadd.f32 %v700, %v834
        %v838 = vld [vmem:[%s5 + $0x7] sm:$0x1]
        %v839 = vld [vmem:[%s5 + $0x8] sm:$0x1]
        %v840 = vsel %vm377, %v836, 0.0
        %841 = vadd.xlane.f32.xlu0 %v840
        %v842 = vpop.xlane.xlu0 %841
        %v843 = vsel %vm377, %v837, 0.0
        %844 = vadd.xlane.f32.xlu0 %v843
        %v845 = vpop.xlane.xlu0 %844
        %v846 = vmul.f32 %v842, %v656
        %v847 = vmul.f32 %v845, %v656
        %v848 = vsub.f32 %v836, %v846
        %v849 = vsub.f32 %v837, %v847
        %v850 = vmul.f32 %v848, %v848
        %v851 = vmul.f32 %v849, %v849
        %v852 = vsel %vm377, %v850, 0.0
        %853 = vadd.xlane.f32.xlu0 %v852
        %v854 = vpop.xlane.xlu0 %853
        %v855 = vsel %vm377, %v851, 0.0
        %856 = vadd.xlane.f32.xlu0 %v855
        %v857 = vpop.xlane.xlu0 %856
        %v858 = vmul.f32 %v854, %v656
        %v859 = vmul.f32 %v857, %v656
        %v860 = vadd.f32 %v858, 1e-05
        %v861 = vadd.f32 %v859, 1e-05
        %v862 = vrsqrt.pop %v860
        %v863 = vmul.f32 %v862, %v860
        %v864 = vmul.f32 %v863, %v862
        %v865 = vmul.f32 0.5, %v864
        %v866 = vsub.f32 1.5, %v865
        %v867 = vmul.f32 %v862, %v866
        %vm868 = vweird.f32 %v860
        %vm869 = vweird.f32 %v862
        %vm870 = vmor %vm868, %vm869
        %v871 = vsel %vm870, %v862, %v867
        %v872 = vrsqrt.pop %v861
        %v873 = vmul.f32 %v872, %v861
        %v874 = vmul.f32 %v873, %v872
        %v875 = vmul.f32 0.5, %v874
        %v876 = vsub.f32 1.5, %v875
        %v877 = vmul.f32 %v872, %v876
        %vm878 = vweird.f32 %v861
        %vm879 = vweird.f32 %v872
        %vm880 = vmor %vm878, %vm879
        %v881 = vsel %vm880, %v872, %v877
        %v882 = vmul.f32 %v848, %v871
        %v883 = vmul.f32 %v849, %v881
        %v884 = vperm.slane %v838, 0
        %v885 = vmul.f32 %v882, %v884
        %v886 = vmul.f32 %v883, %v884
        %v887 = vperm.slane %v839, 0
        %v888 = vadd.f32 %v885, %v887
        %v889 = vadd.f32 %v886, %v887
        %v890 = vld [vmem:[%s5 + $0x9] sm:$0x1]
        %v891 = vld [vmem:[%s5 + $0xa] sm:$0x1]
        %v892 = vsel %vm377, %v888, 0.0
        %893 = vadd.xlane.f32.xlu0 %v892
        %v894 = vpop.xlane.xlu0 %893
        %v895 = vsel %vm377, %v889, 0.0
        %896 = vadd.xlane.f32.xlu0 %v895
        %v897 = vpop.xlane.xlu0 %896
        %v898 = vmul.f32 %v894, %v656
        %v899 = vmul.f32 %v897, %v656
        %v900 = vsub.f32 %v888, %v898
        %v901 = vsub.f32 %v889, %v899
        %v902 = vmul.f32 %v900, %v900
        %v903 = vmul.f32 %v901, %v901
        %v904 = vsel %vm377, %v902, 0.0
        %905 = vadd.xlane.f32.xlu0 %v904
        %v906 = vpop.xlane.xlu0 %905
        %v907 = vsel %vm377, %v903, 0.0
        %908 = vadd.xlane.f32.xlu0 %v907
        %v909 = vpop.xlane.xlu0 %908
        %v910 = vmul.f32 %v906, %v656
        %v911 = vmul.f32 %v909, %v656
        %v912 = vadd.f32 %v910, 1e-05
        %v913 = vadd.f32 %v911, 1e-05
        %v914 = vrsqrt.pop %v912
        %v915 = vmul.f32 %v914, %v912
        %v916 = vmul.f32 %v915, %v914
        %v917 = vmul.f32 0.5, %v916
        %v918 = vsub.f32 1.5, %v917
        %v919 = vmul.f32 %v914, %v918
        %vm920 = vweird.f32 %v912
        %vm921 = vweird.f32 %v914
        %vm922 = vmor %vm920, %vm921
        %v923 = vsel %vm922, %v914, %v919
        %v924 = vrsqrt.pop %v913
        %v925 = vmul.f32 %v924, %v913
        %v926 = vmul.f32 %v925, %v924
        %v927 = vmul.f32 0.5, %v926
        %v928 = vsub.f32 1.5, %v927
        %v929 = vmul.f32 %v924, %v928
        %vm930 = vweird.f32 %v913
        %vm931 = vweird.f32 %v924
        %vm932 = vmor %vm930, %vm931
        %v933 = vsel %vm932, %v924, %v929
        %v934 = vmul.f32 %v900, %v923
        %v935 = vmul.f32 %v901, %v933
        %v936 = vperm.slane %v890, 0
        %v937 = vmul.f32 %v934, %v936
        %v938 = vmul.f32 %v935, %v936
        %v939 = vperm.slane %v891, 0
        %v940 = vadd.f32 %v937, %v939
        %v941 = vadd.f32 %v938, %v939
        %942 = vst.msk [vmem:[%s315] sm:$0xff] %vm377, %v940
        %943 = vst.msk [vmem:[%s315 + $0x8] sm:$0xff] %vm377, %v941
        %v944 = vpack.c.bf16 %v941, %v940
        %v945 = vld [vmem:[%s331] sm:$0xff]
        %v946 = vpack.c.bf16 %v945, %v945
        %s947 = scalar_lea.vmem %s2, 128
        %v948 = vld [vmem:[%s947] sm:$0xf]
        %v949 = vld [vmem:[%s947 + $0x4] sm:$0xf]
        %v950 = vld [vmem:[%s947 + $0x8] sm:$0xf]
        %v951 = vld [vmem:[%s947 + $0xc] sm:$0xf]
        %v952 = vld [vmem:[%s947 + $0x10] sm:$0xf]
        %v953 = vld [vmem:[%s947 + $0x14] sm:$0xf]
        %v954 = vld [vmem:[%s947 + $0x18] sm:$0xf]
        %v955 = vld [vmem:[%s947 + $0x1c] sm:$0xf]
        %v956 = vld [vmem:[%s5 + $0xb] sm:$0x1]
        %v957 = vperm.slane %v956, 0
        %v966 = vunpack.c.l.b16 %v948
        %v967 = vunpack.c.l.b16 %v949
        %v968 = vunpack.c.l.b16 %v950
        %v969 = vunpack.c.l.b16 %v951
        %v970 = vunpack.c.l.b16 %v952
        %v971 = vunpack.c.l.b16 %v953
        %v972 = vunpack.c.l.b16 %v954
        %v973 = vunpack.c.l.b16 %v955
        %v974 = vpack.c.b16 %v967, %v966
        %v975 = vpack.c.b16 %v969, %v968
        %v976 = vpack.c.b16 %v971, %v970
        %v977 = vpack.c.b16 %v973, %v972
        %v983 = vsel %vm377, %v946, 0
        %985 = vmatpush.bf16.msra.mxu0 0
        %986 = vmatpush.bf16.msra.mxu0 0
        %987 = vmatpush.bf16.msra.mxu0 0
        %988 = vmatpush.bf16.msra.mxu0 0
        %989 = vmatpush.bf16.msra.mxu0 %v977
        %990 = vmatpush.bf16.msra.mxu0 %v976
        %991 = vmatpush.bf16.msra.mxu0 %v975
        %992 = vmatpush.bf16.msra.mxu0 %v974
        %993 = vmatmul.bf16.gmra.mxu0 %v983
        %v994 = vpop.f32.mrf.mxu0
        %v995 = vadd.f32 %v957, %v994
        %v996 = vpop.f32.mrf.mxu0
        %997 = vdwg.mxu0
        %s998 = scalar_lea.vmem %s2, 160
        %v999 = vld [vmem:[%s998] sm:$0xf]
        %v1000 = vld [vmem:[%s998 + $0x4] sm:$0xf]
        %v1001 = vld [vmem:[%s998 + $0x8] sm:$0xf]
        %v1002 = vld [vmem:[%s998 + $0xc] sm:$0xf]
        %v1003 = vld [vmem:[%s998 + $0x10] sm:$0xf]
        %v1004 = vld [vmem:[%s998 + $0x14] sm:$0xf]
        %v1005 = vld [vmem:[%s998 + $0x18] sm:$0xf]
        %v1006 = vld [vmem:[%s998 + $0x1c] sm:$0xf]
        %v1007 = vld [vmem:[%s5 + $0xc] sm:$0x1]
        %v1008 = vperm.slane %v1007, 0
        %v1017 = vunpack.c.l.b16 %v999
        %v1018 = vunpack.c.l.b16 %v1000
        %v1019 = vunpack.c.l.b16 %v1001
        %v1020 = vunpack.c.l.b16 %v1002
        %v1021 = vunpack.c.l.b16 %v1003
        %v1022 = vunpack.c.l.b16 %v1004
        %v1023 = vunpack.c.l.b16 %v1005
        %v1024 = vunpack.c.l.b16 %v1006
        %v1025 = vpack.c.b16 %v1018, %v1017
        %v1026 = vpack.c.b16 %v1020, %v1019
        %v1027 = vpack.c.b16 %v1022, %v1021
        %v1028 = vpack.c.b16 %v1024, %v1023
        %1033 = vmatpush.bf16.msra.mxu0 0
        %1034 = vmatpush.bf16.msra.mxu0 0
        %1035 = vmatpush.bf16.msra.mxu0 0
        %1036 = vmatpush.bf16.msra.mxu0 0
        %1037 = vmatpush.bf16.msra.mxu0 %v1028
        %1038 = vmatpush.bf16.msra.mxu0 %v1027
        %1039 = vmatpush.bf16.msra.mxu0 %v1026
        %1040 = vmatpush.bf16.msra.mxu0 %v1025
        %1041 = vmatmul.bf16.gmra.mxu0 %v983
        %v1042 = vpop.f32.mrf.mxu0
        %v1043 = vadd.f32 %v1008, %v1042
        %v1044 = vpop.f32.mrf.mxu0
        %1045 = vdwg.mxu0
        %s1046 = scalar_lea.vmem %s2, 192
        %v1047 = vld [vmem:[%s1046] sm:$0xf]
        %v1048 = vld [vmem:[%s1046 + $0x4] sm:$0xf]
        %v1049 = vld [vmem:[%s1046 + $0x8] sm:$0xf]
        %v1050 = vld [vmem:[%s1046 + $0xc] sm:$0xf]
        %v1051 = vld [vmem:[%s1046 + $0x10] sm:$0xf]
        %v1052 = vld [vmem:[%s1046 + $0x14] sm:$0xf]
        %v1053 = vld [vmem:[%s1046 + $0x18] sm:$0xf]
        %v1054 = vld [vmem:[%s1046 + $0x1c] sm:$0xf]
        %v1055 = vld [vmem:[%s5 + $0xd] sm:$0x1]
        %v1056 = vperm.slane %v1055, 0
        %v1065 = vunpack.c.l.b16 %v1047
        %v1066 = vunpack.c.l.b16 %v1048
        %v1067 = vunpack.c.l.b16 %v1049
        %v1068 = vunpack.c.l.b16 %v1050
        %v1069 = vunpack.c.l.b16 %v1051
        %v1070 = vunpack.c.l.b16 %v1052
        %v1071 = vunpack.c.l.b16 %v1053
        %v1072 = vunpack.c.l.b16 %v1054
        %v1073 = vpack.c.b16 %v1066, %v1065
        %v1074 = vpack.c.b16 %v1068, %v1067
        %v1075 = vpack.c.b16 %v1070, %v1069
        %v1076 = vpack.c.b16 %v1072, %v1071
        %1081 = vmatpush.bf16.msra.mxu0 0
        %1082 = vmatpush.bf16.msra.mxu0 0
        %1083 = vmatpush.bf16.msra.mxu0 0
        %1084 = vmatpush.bf16.msra.mxu0 0
        %1085 = vmatpush.bf16.msra.mxu0 %v1076
        %1086 = vmatpush.bf16.msra.mxu0 %v1075
        %1087 = vmatpush.bf16.msra.mxu0 %v1074
        %1088 = vmatpush.bf16.msra.mxu0 %v1073
        %1089 = vmatmul.bf16.gmra.mxu0 %v983
        %v1090 = vpop.f32.mrf.mxu0
        %v1091 = vadd.f32 %v1056, %v1090
        %v1092 = vpop.f32.mrf.mxu0
        %1093 = vdwg.mxu0
        %v1094 = vpack.c.bf16 %v995, %v995
        %v1095 = vpack.c.bf16 %v1043, %v1043
        %v1097 = vsel %vm377, %v1094, 0
        %v1100 = vsel %vm377, %v1095, 0
        %1102 = vmatpush.bf16.xpose.msra.mxu0 0
        %1103 = vmatpush.bf16.xpose.msra.mxu0 0
        %1104 = vmatpush.bf16.xpose.msra.mxu0 0
        %1105 = vmatpush.bf16.xpose.msra.mxu0 0
        %1106 = vmatpush.bf16.xpose.msra.mxu0 0
        %1107 = vmatpush.bf16.xpose.msra.mxu0 0
        %1108 = vmatpush.bf16.xpose.msra.mxu0 0
        %1109 = vmatpush.bf16.xpose.msra.mxu0 %v1100
        %1110 = vmatmul.bf16.gmra.mxu0 %v1097
        %v1111 = vpop.f32.mrf.mxu0
        %v1112 = vadd.f32 0.0, %v1111
        %v1113 = vpop.f32.mrf.mxu0
        %1114 = vdwg.mxu0
        %v1115 = vmul.f32 %v1112, 0.125
        %v1116 = vsel %vm338, %v1115, -1e+30
        %vm1117 = vcmask 64512
        %v1118 = vsel %vm1117, %v1116, -inf
        %1119 = vmax.xlane.f32.xlu0 %v1118
        %v1120 = vpop.xlane.xlu0 %1119
        %v1121 = vsub.f32 %v1116, %v1120
        %v1122 = vmul.f32 %v1121, 1.442695
        %v1123 = vpow.pop %v1122
        %v1124 = vsel %vm1117, %v1123, 0.0
        %1125 = vadd.xlane.f32.xlu0 %v1124
        %v1126 = vpop.xlane.xlu0 %1125
        %v1127 = vrcp.pop %v1126
        %v1128 = vmul.f32 %v1126, %v1127
        %v1129 = vsub.f32 1.0, %v1128
        %v1130 = vmul.f32 %v1127, %v1129
        %v1131 = vadd.f32 %v1127, %v1130
        %vm1132 = vweird.f32 %v1126
        %vm1133 = vweird.f32 %v1127
        %vm1134 = vmor %vm1132, %vm1133
        %v1135 = vsel %vm1134, %v1127, %v1131
        %v1136 = vand.u32 2147483647, %v1126
        %vm1137 = vcmp.eq.f32.partialorder %v1136, 8.507059e+37
        %v1138 = vand.u32 %v1126, 2147483648
        %v1139 = vor.u32 1.1754944e-38, %v1138
        %v1140 = vsel %vm1137, %v1139, %v1135
        %v1141 = vmul.f32 %v1123, %v1140
        %v1142 = vpack.c.bf16 %v1141, %v1141
        %v1143 = vpack.c.bf16 %v1091, %v1091
        %v1145 = vsel %vm1117, %v1142, 0
        %vm1147 = vcmask 1043456
        %v1149 = vsel %vm1147, %v1143, 0
        %1151 = vmatpush.bf16.msra.mxu0 0
        %1152 = vmatpush.bf16.msra.mxu0 0
        %1153 = vmatpush.bf16.msra.mxu0 0
        %1154 = vmatpush.bf16.msra.mxu0 0
        %1155 = vmatpush.bf16.msra.mxu0 0
        %1156 = vmatpush.bf16.msra.mxu0 0
        %1157 = vmatpush.bf16.msra.mxu0 0
        %1158 = vmatpush.bf16.msra.mxu0 %v1149
        %1159 = vmatmul.bf16.gmra.mxu0 %v1145
        %v1160 = vpop.f32.mrf.mxu0
        %v1161 = vadd.f32 0.0, %v1160
        %v1162 = vpop.f32.mrf.mxu0
        %1163 = vdwg.mxu0
        %v1164 = vpack.c.bf16 %v1161, %v1161
        %s1165 = scalar_lea.vmem %s2, 224
        %v1166 = vld [vmem:[%s1165] sm:$0xf]
        %v1167 = vld [vmem:[%s1165 + $0x4] sm:$0xf]
        %v1168 = vld [vmem:[%s1165 + $0x8] sm:$0xf]
        %v1169 = vld [vmem:[%s1165 + $0xc] sm:$0xf]
        %v1170 = vld [vmem:[%s1165 + $0x10] sm:$0xf]
        %v1171 = vld [vmem:[%s1165 + $0x14] sm:$0xf]
        %v1172 = vld [vmem:[%s1165 + $0x18] sm:$0xf]
        %v1173 = vld [vmem:[%s1165 + $0x1c] sm:$0xf]
        %v1174 = vld [vmem:[%s5 + $0xe] sm:$0x1]
        %v1175 = vperm.slane %v1174, 0
        %v1184 = vunpack.c.l.b16 %v1166
        %v1185 = vunpack.c.l.b16 %v1167
        %v1186 = vunpack.c.l.b16 %v1168
        %v1187 = vunpack.c.l.b16 %v1169
        %v1188 = vunpack.c.l.b16 %v1170
        %v1189 = vunpack.c.l.b16 %v1171
        %v1190 = vunpack.c.l.b16 %v1172
        %v1191 = vunpack.c.l.b16 %v1173
        %v1192 = vpack.c.b16 %v1185, %v1184
        %v1193 = vpack.c.b16 %v1187, %v1186
        %v1194 = vpack.c.b16 %v1189, %v1188
        %v1195 = vpack.c.b16 %v1191, %v1190
        %v1201 = vsel %vm377, %v1164, 0
        %1203 = vmatpush.bf16.msra.mxu0 0
        %1204 = vmatpush.bf16.msra.mxu0 0
        %1205 = vmatpush.bf16.msra.mxu0 0
        %1206 = vmatpush.bf16.msra.mxu0 0
        %1207 = vmatpush.bf16.msra.mxu0 %v1195
        %1208 = vmatpush.bf16.msra.mxu0 %v1194
        %1209 = vmatpush.bf16.msra.mxu0 %v1193
        %1210 = vmatpush.bf16.msra.mxu0 %v1192
        %1211 = vmatmul.bf16.gmra.mxu0 %v1201
        %v1212 = vpop.f32.mrf.mxu0
        %v1213 = vadd.f32 %v1175, %v1212
        %v1214 = vpop.f32.mrf.mxu0
        %1215 = vdwg.mxu0
        %v1216 = vadd.f32 %v945, %v1213
        %v1217 = vld [vmem:[%s5 + $0x14] sm:$0x1]
        %v1218 = vld [vmem:[%s5 + $0x15] sm:$0x1]
        %v1219 = vsel %vm377, %v1216, 0.0
        %1220 = vadd.xlane.f32.xlu0 %v1219
        %v1221 = vpop.xlane.xlu0 %1220
        %v1222 = vmul.f32 %v1221, %v656
        %v1223 = vsub.f32 %v1216, %v1222
        %v1224 = vmul.f32 %v1223, %v1223
        %v1225 = vsel %vm377, %v1224, 0.0
        %1226 = vadd.xlane.f32.xlu0 %v1225
        %v1227 = vpop.xlane.xlu0 %1226
        %v1228 = vmul.f32 %v1227, %v656
        %v1229 = vadd.f32 %v1228, 1e-05
        %v1230 = vrsqrt.pop %v1229
        %v1231 = vmul.f32 %v1230, %v1229
        %v1232 = vmul.f32 %v1231, %v1230
        %v1233 = vmul.f32 0.5, %v1232
        %v1234 = vsub.f32 1.5, %v1233
        %v1235 = vmul.f32 %v1230, %v1234
        %vm1236 = vweird.f32 %v1229
        %vm1237 = vweird.f32 %v1230
        %vm1238 = vmor %vm1236, %vm1237
        %v1239 = vsel %vm1238, %v1230, %v1235
        %v1240 = vmul.f32 %v1223, %v1239
        %v1241 = vperm.slane %v1217, 0
        %v1242 = vmul.f32 %v1240, %v1241
        %v1243 = vperm.slane %v1218, 0
        %v1244 = vadd.f32 %v1242, %v1243
        %v1245 = vpack.c.bf16 %v1244, %v1244
        %s1246 = scalar_lea.vmem %s2, 256
        %v1247 = vld [vmem:[%s1246] sm:$0xf]
        %v1248 = vld [vmem:[%s1246 + $0x4] sm:$0xf]
        %v1249 = vld [vmem:[%s1246 + $0x8] sm:$0xf]
        %v1250 = vld [vmem:[%s1246 + $0xc] sm:$0xf]
        %v1251 = vld [vmem:[%s1246 + $0x10] sm:$0xf]
        %v1252 = vld [vmem:[%s1246 + $0x14] sm:$0xf]
        %v1253 = vld [vmem:[%s1246 + $0x18] sm:$0xf]
        %v1254 = vld [vmem:[%s1246 + $0x1c] sm:$0xf]
        %v1255 = vld [vmem:[%s5 + $0xf] sm:$0x1]
        %v1256 = vperm.slane %v1255, 0
        %v1265 = vunpack.c.l.b16 %v1247
        %v1266 = vunpack.c.l.b16 %v1248
        %v1267 = vunpack.c.l.b16 %v1249
        %v1268 = vunpack.c.l.b16 %v1250
        %v1269 = vunpack.c.l.b16 %v1251
        %v1270 = vunpack.c.l.b16 %v1252
        %v1271 = vunpack.c.l.b16 %v1253
        %v1272 = vunpack.c.l.b16 %v1254
        %v1273 = vpack.c.b16 %v1266, %v1265
        %v1274 = vpack.c.b16 %v1268, %v1267
        %v1275 = vpack.c.b16 %v1270, %v1269
        %v1276 = vpack.c.b16 %v1272, %v1271
        %v1282 = vsel %vm377, %v1245, 0
        %1284 = vmatpush.bf16.msra.mxu0 0
        %1285 = vmatpush.bf16.msra.mxu0 0
        %1286 = vmatpush.bf16.msra.mxu0 0
        %1287 = vmatpush.bf16.msra.mxu0 0
        %1288 = vmatpush.bf16.msra.mxu0 %v1276
        %1289 = vmatpush.bf16.msra.mxu0 %v1275
        %1290 = vmatpush.bf16.msra.mxu0 %v1274
        %1291 = vmatpush.bf16.msra.mxu0 %v1273
        %1292 = vmatmul.bf16.gmra.mxu0 %v1282
        %v1293 = vpop.f32.mrf.mxu0
        %v1294 = vadd.f32 %v1256, %v1293
        %v1295 = vpop.f32.mrf.mxu0
        %1296 = vdwg.mxu0
        %s1297 = scalar_lea.vmem %s2, 288
        %v1298 = vld [vmem:[%s1297] sm:$0xf]
        %v1299 = vld [vmem:[%s1297 + $0x4] sm:$0xf]
        %v1300 = vld [vmem:[%s1297 + $0x8] sm:$0xf]
        %v1301 = vld [vmem:[%s1297 + $0xc] sm:$0xf]
        %v1302 = vld [vmem:[%s1297 + $0x10] sm:$0xf]
        %v1303 = vld [vmem:[%s1297 + $0x14] sm:$0xf]
        %v1304 = vld [vmem:[%s1297 + $0x18] sm:$0xf]
        %v1305 = vld [vmem:[%s1297 + $0x1c] sm:$0xf]
        %v1306 = vld [vmem:[%s5 + $0x10] sm:$0x1]
        %v1307 = vperm.slane %v1306, 0
        %v1316 = vunpack.c.l.b16 %v1298
        %v1317 = vunpack.c.l.b16 %v1299
        %v1318 = vunpack.c.l.b16 %v1300
        %v1319 = vunpack.c.l.b16 %v1301
        %v1320 = vunpack.c.l.b16 %v1302
        %v1321 = vunpack.c.l.b16 %v1303
        %v1322 = vunpack.c.l.b16 %v1304
        %v1323 = vunpack.c.l.b16 %v1305
        %v1324 = vpack.c.b16 %v1317, %v1316
        %v1325 = vpack.c.b16 %v1319, %v1318
        %v1326 = vpack.c.b16 %v1321, %v1320
        %v1327 = vpack.c.b16 %v1323, %v1322
        %v1333 = vsel %vm377, %v944, 0
        %1335 = vmatpush.bf16.msra.mxu0 0
        %1336 = vmatpush.bf16.msra.mxu0 0
        %1337 = vmatpush.bf16.msra.mxu0 0
        %1338 = vmatpush.bf16.msra.mxu0 0
        %1339 = vmatpush.bf16.msra.mxu0 %v1327
        %1340 = vmatpush.bf16.msra.mxu0 %v1326
        %1341 = vmatpush.bf16.msra.mxu0 %v1325
        %1342 = vmatpush.bf16.msra.mxu0 %v1324
        %1343 = vmatmul.bf16.gmra.mxu0 %v1333
        %v1344 = vpop.f32.mrf.mxu0
        %v1345 = vadd.f32 %v1307, %v1344
        %v1346 = vpop.f32.mrf.mxu0
        %v1347 = vadd.f32 %v1307, %v1346
        %1348 = vdwg.mxu0
        %s1349 = scalar_lea.vmem %s2, 320
        %v1350 = vld [vmem:[%s1349] sm:$0xf]
        %v1351 = vld [vmem:[%s1349 + $0x4] sm:$0xf]
        %v1352 = vld [vmem:[%s1349 + $0x8] sm:$0xf]
        %v1353 = vld [vmem:[%s1349 + $0xc] sm:$0xf]
        %v1354 = vld [vmem:[%s1349 + $0x10] sm:$0xf]
        %v1355 = vld [vmem:[%s1349 + $0x14] sm:$0xf]
        %v1356 = vld [vmem:[%s1349 + $0x18] sm:$0xf]
        %v1357 = vld [vmem:[%s1349 + $0x1c] sm:$0xf]
        %v1358 = vld [vmem:[%s5 + $0x11] sm:$0x1]
        %v1359 = vperm.slane %v1358, 0
        %v1368 = vunpack.c.l.b16 %v1350
        %v1369 = vunpack.c.l.b16 %v1351
        %v1370 = vunpack.c.l.b16 %v1352
        %v1371 = vunpack.c.l.b16 %v1353
        %v1372 = vunpack.c.l.b16 %v1354
        %v1373 = vunpack.c.l.b16 %v1355
        %v1374 = vunpack.c.l.b16 %v1356
        %v1375 = vunpack.c.l.b16 %v1357
        %v1376 = vpack.c.b16 %v1369, %v1368
        %v1377 = vpack.c.b16 %v1371, %v1370
        %v1378 = vpack.c.b16 %v1373, %v1372
        %v1379 = vpack.c.b16 %v1375, %v1374
        %1384 = vmatpush.bf16.msra.mxu0 0
        %1385 = vmatpush.bf16.msra.mxu0 0
        %1386 = vmatpush.bf16.msra.mxu0 0
        %1387 = vmatpush.bf16.msra.mxu0 0
        %1388 = vmatpush.bf16.msra.mxu0 %v1379
        %1389 = vmatpush.bf16.msra.mxu0 %v1378
        %1390 = vmatpush.bf16.msra.mxu0 %v1377
        %1391 = vmatpush.bf16.msra.mxu0 %v1376
        %1392 = vmatmul.bf16.gmra.mxu0 %v1333
        %v1393 = vpop.f32.mrf.mxu0
        %v1394 = vadd.f32 %v1359, %v1393
        %v1395 = vpop.f32.mrf.mxu0
        %v1396 = vadd.f32 %v1359, %v1395
        %1397 = vdwg.mxu0
        %v1398 = vpack.c.bf16 %v1294, %v1294
        %v1399 = vpack.c.bf16 %v1347, %v1345
        %v1401 = vsel %vm377, %v1398, 0
        %v1404 = vsel %vm377, %v1399, 0
        %1406 = vmatpush.bf16.xpose.msra.mxu0 0
        %1407 = vmatpush.bf16.xpose.msra.mxu0 0
        %1408 = vmatpush.bf16.xpose.msra.mxu0 0
        %1409 = vmatpush.bf16.xpose.msra.mxu0 0
        %1410 = vmatpush.bf16.xpose.msra.mxu0 0
        %1411 = vmatpush.bf16.xpose.msra.mxu0 0
        %1412 = vmatpush.bf16.xpose.msra.mxu0 0
        %1413 = vmatpush.bf16.xpose.msra.mxu0 %v1404
        %1414 = vmatmul.bf16.gmra.mxu0 %v1401
        %v1415 = vpop.f32.mrf.mxu0
        %v1416 = vadd.f32 0.0, %v1415
        %v1417 = vpop.f32.mrf.mxu0
        %1418 = vdwg.mxu0
        %v1419 = vmul.f32 %v1416, 0.125
        %v1420 = vsel %vm519, %v1419, -inf
        %1421 = vmax.xlane.f32.xlu0 %v1420
        %v1422 = vpop.xlane.xlu0 %1421
        %v1423 = vsub.f32 %v1419, %v1422
        %v1424 = vmul.f32 %v1423, 1.442695
        %v1425 = vpow.pop %v1424
        %v1426 = vsel %vm519, %v1425, 0.0
        %1427 = vadd.xlane.f32.xlu0 %v1426
        %v1428 = vpop.xlane.xlu0 %1427
        %v1429 = vrcp.pop %v1428
        %v1430 = vmul.f32 %v1428, %v1429
        %v1431 = vsub.f32 1.0, %v1430
        %v1432 = vmul.f32 %v1429, %v1431
        %v1433 = vadd.f32 %v1429, %v1432
        %vm1434 = vweird.f32 %v1428
        %vm1435 = vweird.f32 %v1429
        %vm1436 = vmor %vm1434, %vm1435
        %v1437 = vsel %vm1436, %v1429, %v1433
        %v1438 = vand.u32 2147483647, %v1428
        %vm1439 = vcmp.eq.f32.partialorder %v1438, 8.507059e+37
        %v1440 = vand.u32 %v1428, 2147483648
        %v1441 = vor.u32 1.1754944e-38, %v1440
        %v1442 = vsel %vm1439, %v1441, %v1437
        %v1443 = vmul.f32 %v1425, %v1442
        %v1444 = vpack.c.bf16 %v1443, %v1443
        %v1445 = vpack.c.bf16 %v1396, %v1394
        %v1447 = vsel %vm519, %v1444, 0
        %1449 = vmatpush.bf16.msra.mxu0 0
        %1450 = vmatpush.bf16.msra.mxu0 0
        %1451 = vmatpush.bf16.msra.mxu0 0
        %1452 = vmatpush.bf16.msra.mxu0 0
        %1453 = vmatpush.bf16.msra.mxu0 0
        %1454 = vmatpush.bf16.msra.mxu0 0
        %1455 = vmatpush.bf16.msra.mxu0 0
        %1456 = vmatpush.bf16.msra.mxu0 %v1445
        %1457 = vmatmul.bf16.gmra.mxu0 %v1447
        %v1458 = vpop.f32.mrf.mxu0
        %v1459 = vadd.f32 0.0, %v1458
        %v1460 = vpop.f32.mrf.mxu0
        %1461 = vdwg.mxu0
        %v1462 = vpack.c.bf16 %v1459, %v1459
        %s1463 = scalar_lea.vmem %s2, 352
        %v1464 = vld [vmem:[%s1463] sm:$0xf]
        %v1465 = vld [vmem:[%s1463 + $0x4] sm:$0xf]
        %v1466 = vld [vmem:[%s1463 + $0x8] sm:$0xf]
        %v1467 = vld [vmem:[%s1463 + $0xc] sm:$0xf]
        %v1468 = vld [vmem:[%s1463 + $0x10] sm:$0xf]
        %v1469 = vld [vmem:[%s1463 + $0x14] sm:$0xf]
        %v1470 = vld [vmem:[%s1463 + $0x18] sm:$0xf]
        %v1471 = vld [vmem:[%s1463 + $0x1c] sm:$0xf]
        %v1472 = vld [vmem:[%s5 + $0x12] sm:$0x1]
        %v1473 = vperm.slane %v1472, 0
        %v1482 = vunpack.c.l.b16 %v1464
        %v1483 = vunpack.c.l.b16 %v1465
        %v1484 = vunpack.c.l.b16 %v1466
        %v1485 = vunpack.c.l.b16 %v1467
        %v1486 = vunpack.c.l.b16 %v1468
        %v1487 = vunpack.c.l.b16 %v1469
        %v1488 = vunpack.c.l.b16 %v1470
        %v1489 = vunpack.c.l.b16 %v1471
        %v1490 = vpack.c.b16 %v1483, %v1482
        %v1491 = vpack.c.b16 %v1485, %v1484
        %v1492 = vpack.c.b16 %v1487, %v1486
        %v1493 = vpack.c.b16 %v1489, %v1488
        %v1499 = vsel %vm377, %v1462, 0
        %1501 = vmatpush.bf16.msra.mxu0 0
        %1502 = vmatpush.bf16.msra.mxu0 0
        %1503 = vmatpush.bf16.msra.mxu0 0
        %1504 = vmatpush.bf16.msra.mxu0 0
        %1505 = vmatpush.bf16.msra.mxu0 %v1493
        %1506 = vmatpush.bf16.msra.mxu0 %v1492
        %1507 = vmatpush.bf16.msra.mxu0 %v1491
        %1508 = vmatpush.bf16.msra.mxu0 %v1490
        %1509 = vmatmul.bf16.gmra.mxu0 %v1499
        %v1510 = vpop.f32.mrf.mxu0
        %v1511 = vadd.f32 %v1473, %v1510
        %v1512 = vpop.f32.mrf.mxu0
        %1513 = vdwg.mxu0
        %v1514 = vadd.f32 %v1244, %v1511
        %v1515 = vld [vmem:[%s5 + $0x16] sm:$0x1]
        %v1516 = vld [vmem:[%s5 + $0x17] sm:$0x1]
        %v1517 = vsel %vm377, %v1514, 0.0
        %1518 = vadd.xlane.f32.xlu0 %v1517
        %v1519 = vpop.xlane.xlu0 %1518
        %v1520 = vmul.f32 %v1519, %v656
        %v1521 = vsub.f32 %v1514, %v1520
        %v1522 = vmul.f32 %v1521, %v1521
        %v1523 = vsel %vm377, %v1522, 0.0
        %1524 = vadd.xlane.f32.xlu0 %v1523
        %v1525 = vpop.xlane.xlu0 %1524
        %v1526 = vmul.f32 %v1525, %v656
        %v1527 = vadd.f32 %v1526, 1e-05
        %v1528 = vrsqrt.pop %v1527
        %v1529 = vmul.f32 %v1528, %v1527
        %v1530 = vmul.f32 %v1529, %v1528
        %v1531 = vmul.f32 0.5, %v1530
        %v1532 = vsub.f32 1.5, %v1531
        %v1533 = vmul.f32 %v1528, %v1532
        %vm1534 = vweird.f32 %v1527
        %vm1535 = vweird.f32 %v1528
        %vm1536 = vmor %vm1534, %vm1535
        %v1537 = vsel %vm1536, %v1528, %v1533
        %v1538 = vmul.f32 %v1521, %v1537
        %v1539 = vperm.slane %v1515, 0
        %v1540 = vmul.f32 %v1538, %v1539
        %v1541 = vperm.slane %v1516, 0
        %v1542 = vadd.f32 %v1540, %v1541
        %v1543 = vpack.c.bf16 %v1542, %v1542
        %s1544 = scalar_lea.vmem %s3, 32
        %v1545 = vld [vmem:[%s1544] sm:$0xf]
        %v1546 = vld [vmem:[%s1544 + $0x4] sm:$0xf]
        %v1547 = vld [vmem:[%s1544 + $0x8] sm:$0xf]
        %v1548 = vld [vmem:[%s1544 + $0xc] sm:$0xf]
        %v1549 = vld [vmem:[%s1544 + $0x10] sm:$0xf]
        %v1550 = vld [vmem:[%s1544 + $0x14] sm:$0xf]
        %v1551 = vld [vmem:[%s1544 + $0x18] sm:$0xf]
        %v1552 = vld [vmem:[%s1544 + $0x1c] sm:$0xf]
        %v1553 = vld [vmem:[%s6 + $0x1] sm:$0x1]
        %v1554 = vperm.slane %v1553, 0
        %v1563 = vunpack.c.l.b16 %v1545
        %v1564 = vunpack.c.l.b16 %v1546
        %v1565 = vunpack.c.l.b16 %v1547
        %v1566 = vunpack.c.l.b16 %v1548
        %v1567 = vunpack.c.l.b16 %v1549
        %v1568 = vunpack.c.l.b16 %v1550
        %v1569 = vunpack.c.l.b16 %v1551
        %v1570 = vunpack.c.l.b16 %v1552
        %v1571 = vpack.c.b16 %v1564, %v1563
        %v1572 = vpack.c.b16 %v1566, %v1565
        %v1573 = vpack.c.b16 %v1568, %v1567
        %v1574 = vpack.c.b16 %v1570, %v1569
        %v1580 = vsel %vm377, %v1543, 0
        %1582 = vmatpush.bf16.msra.mxu0 0
        %1583 = vmatpush.bf16.msra.mxu0 0
        %1584 = vmatpush.bf16.msra.mxu0 0
        %1585 = vmatpush.bf16.msra.mxu0 0
        %1586 = vmatpush.bf16.msra.mxu0 %v1574
        %1587 = vmatpush.bf16.msra.mxu0 %v1573
        %1588 = vmatpush.bf16.msra.mxu0 %v1572
        %1589 = vmatpush.bf16.msra.mxu0 %v1571
        %1590 = vmatmul.bf16.gmra.mxu0 %v1580
        %v1591 = vpop.f32.mrf.mxu0
        %v1592 = vadd.f32 %v1554, %v1591
        %v1593 = vpop.f32.mrf.mxu0
        %1594 = vdwg.mxu0
        %v1595 = vmax.f32 %v1592, 0.0
        %v1596 = vpack.c.bf16 %v1595, %v1595
        %s1597 = scalar_lea.vmem %s4, 64
        %v1598 = vld [vmem:[%s1597] sm:$0xf]
        %v1599 = vld [vmem:[%s1597 + $0x4] sm:$0xf]
        %v1600 = vld [vmem:[%s1597 + $0x8] sm:$0xf]
        %v1601 = vld [vmem:[%s1597 + $0xc] sm:$0xf]
        %v1602 = vld [vmem:[%s1597 + $0x10] sm:$0xf]
        %v1603 = vld [vmem:[%s1597 + $0x14] sm:$0xf]
        %v1604 = vld [vmem:[%s1597 + $0x18] sm:$0xf]
        %v1605 = vld [vmem:[%s1597 + $0x1c] sm:$0xf]
        %v1606 = vld [vmem:[%s1597 + $0x20] sm:$0xf]
        %v1607 = vld [vmem:[%s1597 + $0x24] sm:$0xf]
        %v1608 = vld [vmem:[%s1597 + $0x28] sm:$0xf]
        %v1609 = vld [vmem:[%s1597 + $0x2c] sm:$0xf]
        %v1610 = vld [vmem:[%s1597 + $0x30] sm:$0xf]
        %v1611 = vld [vmem:[%s1597 + $0x34] sm:$0xf]
        %v1612 = vld [vmem:[%s1597 + $0x38] sm:$0xf]
        %v1613 = vld [vmem:[%s1597 + $0x3c] sm:$0xf]
        %v1614 = vld [vmem:[%s5 + $0x13] sm:$0x1]
        %v1615 = vperm.slane %v1614, 0
        %v1632 = vunpack.c.l.b16 %v1598
        %v1633 = vunpack.c.l.b16 %v1599
        %v1634 = vunpack.c.l.b16 %v1600
        %v1635 = vunpack.c.l.b16 %v1601
        %v1636 = vunpack.c.l.b16 %v1602
        %v1637 = vunpack.c.l.b16 %v1603
        %v1638 = vunpack.c.l.b16 %v1604
        %v1639 = vunpack.c.l.b16 %v1605
        %v1640 = vunpack.c.l.b16 %v1606
        %v1641 = vunpack.c.l.b16 %v1607
        %v1642 = vunpack.c.l.b16 %v1608
        %v1643 = vunpack.c.l.b16 %v1609
        %v1644 = vunpack.c.l.b16 %v1610
        %v1645 = vunpack.c.l.b16 %v1611
        %v1646 = vunpack.c.l.b16 %v1612
        %v1647 = vunpack.c.l.b16 %v1613
        %v1648 = vpack.c.b16 %v1633, %v1632
        %v1649 = vpack.c.b16 %v1635, %v1634
        %v1650 = vpack.c.b16 %v1637, %v1636
        %v1651 = vpack.c.b16 %v1639, %v1638
        %v1652 = vpack.c.b16 %v1641, %v1640
        %v1653 = vpack.c.b16 %v1643, %v1642
        %v1654 = vpack.c.b16 %v1645, %v1644
        %v1655 = vpack.c.b16 %v1647, %v1646
        %1664 = vmatpush.bf16.msra.mxu0 %v1655
        %1665 = vmatpush.bf16.msra.mxu0 %v1654
        %1666 = vmatpush.bf16.msra.mxu0 %v1653
        %1667 = vmatpush.bf16.msra.mxu0 %v1652
        %1668 = vmatpush.bf16.msra.mxu0 %v1651
        %1669 = vmatpush.bf16.msra.mxu0 %v1650
        %1670 = vmatpush.bf16.msra.mxu0 %v1649
        %1671 = vmatpush.bf16.msra.mxu0 %v1648
        %1672 = vmatmul.bf16.gmra.mxu0 %v1596
        %v1673 = vpop.f32.mrf.mxu0
        %v1674 = vadd.f32 %v1615, %v1673
        %v1675 = vpop.f32.mrf.mxu0
        %1676 = vdwg.mxu0
        %v1677 = vadd.f32 %v1542, %v1674
        %v1678 = vld [vmem:[%s5 + $0x18] sm:$0x1]
        %v1679 = vld [vmem:[%s5 + $0x19] sm:$0x1]
        %v1680 = vsel %vm377, %v1677, 0.0
        %1681 = vadd.xlane.f32.xlu0 %v1680
        %v1682 = vpop.xlane.xlu0 %1681
        %v1683 = vmul.f32 %v1682, %v656
        %v1684 = vsub.f32 %v1677, %v1683
        %v1685 = vmul.f32 %v1684, %v1684
        %v1686 = vsel %vm377, %v1685, 0.0
        %1687 = vadd.xlane.f32.xlu0 %v1686
        %v1688 = vpop.xlane.xlu0 %1687
        %v1689 = vmul.f32 %v1688, %v656
        %v1690 = vadd.f32 %v1689, 1e-05
        %v1691 = vrsqrt.pop %v1690
        %v1692 = vmul.f32 %v1691, %v1690
        %v1693 = vmul.f32 %v1692, %v1691
        %v1694 = vmul.f32 0.5, %v1693
        %v1695 = vsub.f32 1.5, %v1694
        %v1696 = vmul.f32 %v1691, %v1695
        %vm1697 = vweird.f32 %v1690
        %vm1698 = vweird.f32 %v1691
        %vm1699 = vmor %vm1697, %vm1698
        %v1700 = vsel %vm1699, %v1691, %v1696
        %v1701 = vmul.f32 %v1684, %v1700
        %v1702 = vperm.slane %v1678, 0
        %v1703 = vmul.f32 %v1701, %v1702
        %v1704 = vperm.slane %v1679, 0
        %v1705 = vadd.f32 %v1703, %v1704
        %v1706 = vld [vmem:[%s5 + $0x1a] sm:$0x1]
        %v1707 = vld [vmem:[%s5 + $0x1b] sm:$0x1]
        %v1708 = vsel %vm377, %v1705, 0.0
        %1709 = vadd.xlane.f32.xlu0 %v1708
        %v1710 = vpop.xlane.xlu0 %1709
        %v1711 = vmul.f32 %v1710, %v656
        %v1712 = vsub.f32 %v1705, %v1711
        %v1713 = vmul.f32 %v1712, %v1712
        %v1714 = vsel %vm377, %v1713, 0.0
        %1715 = vadd.xlane.f32.xlu0 %v1714
        %v1716 = vpop.xlane.xlu0 %1715
        %v1717 = vmul.f32 %v1716, %v656
        %v1718 = vadd.f32 %v1717, 1e-05
        %v1719 = vrsqrt.pop %v1718
        %v1720 = vmul.f32 %v1719, %v1718
        %v1721 = vmul.f32 %v1720, %v1719
        %v1722 = vmul.f32 0.5, %v1721
        %v1723 = vsub.f32 1.5, %v1722
        %v1724 = vmul.f32 %v1719, %v1723
        %vm1725 = vweird.f32 %v1718
        %vm1726 = vweird.f32 %v1719
        %vm1727 = vmor %vm1725, %vm1726
        %v1728 = vsel %vm1727, %v1719, %v1724
        %v1729 = vmul.f32 %v1712, %v1728
        %v1730 = vperm.slane %v1706, 0
        %v1731 = vmul.f32 %v1729, %v1730
        %v1732 = vperm.slane %v1707, 0
        %v1733 = vadd.f32 %v1731, %v1732
        %1734 = vst.msk [vmem:[%s322] sm:$0xff] %vm377, %v1733
        %s1735 = sand.u32 %s191, 1
        %s1736 = scalar_lea.sflag [#allocation3], %s1735
        %s1737 = sand.u32 %s191, 1
        %s1738 = smul.addr %s1737, 16
        %s1739 = scalar_lea.vmem [#allocation2], %s1738
        %s1740 = sand.u32 %s217, 1
        %s1741 = scalar_lea.sflag [#allocation5], %s1740
        %s1742 = sand.u32 %s217, 1
        %s1743 = smul.addr %s1742, 8
        %s1744 = scalar_lea.vmem [#allocation4], %s1743
        // Predicated region
        $region49: #{hfp_transformer_forward.1} parent=47 // pred_check
          %p1745 = pneg %p201
        $region50: #{hfp_transformer_forward.1} parent=47 // pred_check_branch
          %1747 = sbr.rel (%p1745) target = $region52
        $region51: #{hfp_transformer_forward.1} parent=47 // pred_region
          %1749 = vsyncadd %s1736, 0
          %s1750 = smul.addr %s26, 2
          %s1751 = smul.addr %s1750, 8
          %s1752 = scalar_lea.hbm %s7, %s1751
          %s1753 = sshll.u32 %s1739, 4
          %s1754 = int_to_ptr.vmem [resolvable:$true] %s1753
          %s1755 = sshll.u32 %s1752, 4
          %s1756 = int_to_ptr.hbm [resolvable:$true] %s1755
          %1761 = dma.vmem_to_hbm [thread:$0]  %s1754, 256, %s1756, %s1736, 128, 128, 8
        $region52: #{hfp_transformer_forward.1} parent=47 // pred_fallthru
          _
        // Predicated region
        $region53: #{hfp_transformer_forward.1} parent=47 // pred_check
          %p1762 = pneg %p227
        $region54: #{hfp_transformer_forward.1} parent=47 // pred_check_branch
          %1764 = sbr.rel (%p1762) target = $region56
        $region55: #{hfp_transformer_forward.1} parent=47 // pred_region
          %1766 = vsyncadd %s1741, 0
          %s1767 = smul.addr %s26, 8
          %s1768 = scalar_lea.hbm %s8, %s1767
          %s1770 = sshll.u32 %s1744, 4
          %s1771 = int_to_ptr.vmem [resolvable:$true] %s1770
          %s1772 = sshll.u32 %s1768, 4
          %s1773 = int_to_ptr.hbm [resolvable:$true] %s1772
          %1775 = dma.vmem_to_hbm [thread:$0]  %s1771, 128, %s1773, %s1741
        $region56: #{hfp_transformer_forward.1} parent=47 // pred_fallthru
          _
      $region48: #{hfp_transformer_forward.1} parent=5 // pred_fallthru
        _
      %p1776 = scmp.le.s32.totalorder 2, %s21
      // Predicated region
      $region57: #{hfp_transformer_forward.1} parent=5 // pred_check
        %p1777 = pneg %p1776
      $region58: #{hfp_transformer_forward.1} parent=5 // pred_check_branch
        %1779 = sbr.rel (%p1777) target = $region60
      $region59: #{hfp_transformer_forward.1} parent=5 // pred_region
        %s1780 = ssub.s32 %s21, 2
        // Predicated region
        $region61: #{hfp_transformer_forward.1} parent=59 // pred_check
          %p1781 = pneg %p207
        $region62: #{hfp_transformer_forward.1} parent=59 // pred_check_branch
          %1783 = sbr.rel (%p1781) target = $region64
        $region63: #{hfp_transformer_forward.1} parent=59 // pred_region
          %s1784 = sand.u32 %s192, 1
          %s1785 = scalar_lea.sflag [#allocation3], %s1784
          %s1786 = sand.u32 %s192, 1
          %s1787 = smul.addr %s1786, 16
          %s1788 = scalar_lea.vmem [#allocation2], %s1787
          %1790 = dma.done %s1785, 256
        $region64: #{hfp_transformer_forward.1} parent=59 // pred_fallthru
          _
        // Predicated region
        $region65: #{hfp_transformer_forward.1} parent=59 // pred_check
          %p1791 = pneg %p233
        $region66: #{hfp_transformer_forward.1} parent=59 // pred_check_branch
          %1793 = sbr.rel (%p1791) target = $region68
        $region67: #{hfp_transformer_forward.1} parent=59 // pred_region
          %s1794 = sand.u32 %s218, 1
          %s1795 = scalar_lea.sflag [#allocation5], %s1794
          %s1796 = sand.u32 %s218, 1
          %s1797 = smul.addr %s1796, 8
          %s1798 = scalar_lea.vmem [#allocation4], %s1797
          %1800 = dma.done %s1795, 128
        $region68: #{hfp_transformer_forward.1} parent=59 // pred_fallthru
          _
      $region60: #{hfp_transformer_forward.1} parent=5 // pred_fallthru
        _
    $region6: #{hfp_transformer_forward.1} parent=1 // loop_footer
      %s25 = sadd.s32 1, %s21
    $region7: #{hfp_transformer_forward.1} parent=1 // loop_footer_branch
      %20 = sbr.rel target = $region3
    $region8: #{hfp_transformer_forward.1} parent=1 // loop_exit
      _
    %1801 = vsyncpa [#allocation3], 1
    %s1802 = scalar_lea.sflag [#allocation3], 1
    %1803 = vsyncpa %s1802, 1
    %1804 = vsyncpa [#allocation5], 1
    %s1805 = scalar_lea.sflag [#allocation5], 1
    %1806 = vsyncpa %s1805, 1

</llo_original>
